<compile_context>
chip_gen: v5e
topology: v5e:2x2
jax: 0.10.0
libtpu: 0.0.40
codegen_flags: <defaults>
</compile_context>

<pallas_src>
import numpy as np
import jax
import jax.numpy as jnp
from jax.experimental import pallas as pl
from jax.experimental.pallas import tpu as pltpu

_LANES = 128
_TILE_BYTES_CAP = 4 * 1024 * 1024      # per output buffer (Pallas double-buffers it)
_SEL_BYTES_CAP = 1 * 1024 * 1024       # budget for the resident fold selector matrix
_VMEM_LIMIT_BYTES = 32 * 1024 * 1024   # explicit scoped-VMEM limit, safe on v5e/v6e/v7x
_DEFAULT_TILE_ROWS = 8192              # 8192 rows x 128 lanes x f32 = 4 MiB / buffer


def _time_encode_fold_kernel(t_ref, sel_ref, w_ref, b_ref, o_ref):
    # t_ref: (tile_m, k) f32   -- k timestamps folded per lane-dense output row
    # sel_ref: (k, cols) f32   -- 0/1 selector, expands t across the k lane groups
    # w_ref/b_ref: (1, cols)   -- weights/bias tiled k times along lanes (resident)
    # o_ref: (tile_m, cols)    -- lane-dense output tile (cols % 128 == 0)
    t_exp = jnp.dot(t_ref[...], sel_ref[...], preferred_element_type=jnp.float32)
    o_ref[...] = jnp.cos(t_exp * w_ref[...] + b_ref[...]).astype(o_ref.dtype)


def _time_encode_bcast_kernel(t_ref, w_ref, b_ref, o_ref):
    # t_ref: (tile_m, 1) f32; w_ref/b_ref: (1, cols); o_ref: (tile_m, cols)
    # Pure VPU broadcast multiply-add + EUP cos (no MXU).
    o_ref[...] = jnp.cos(t_ref[...] * w_ref[...] + b_ref[...]).astype(o_ref.dtype)


def init_time_encode_params(dimension: int):
    """Deterministic init matching TimeEncode.__init__ (torch.nn.Linear(1, D))."""
    if dimension == 0:
        return (jnp.zeros((0, 1), jnp.float32), jnp.zeros((0,), jnp.float32))
    base_freq = np.arange(0, dimension, 2, dtype=np.float32) / float(dimension)
    inv_freq = 1.0 / (10000.0 ** base_freq)
    init_weight_val = np.repeat(inv_freq, 2)[:dimension]          # repeat_interleave(2)
    weight = jnp.asarray(init_weight_val, jnp.float32).reshape(dimension, 1)  # (D, 1)
    bias = jnp.zeros((dimension,), jnp.float32)                   # (D,)
    return weight, bias


def _round_up(x: int, m: int) -> int:
    return ((x + m - 1) // m) * m


def time_encode(t, weight, bias, *, tile_rows: int = _DEFAULT_TILE_ROWS,
                out_dtype=jnp.float32):
    """Forward pass of TimeEncode using a Pallas TPU kernel.

    t: [N] or [N, 1]; weight: [D, 1]; bias: [D]  ->  [N, D] (out_dtype, default f32)
    """
    if t.ndim == 1:
        t = t[:, None]
    t = t.astype(jnp.float32)
    N = int(t.shape[0])
    D = int(weight.shape[0])
    if D == 0 or N == 0:
        return jnp.zeros((N, D), out_dtype)

    w = weight.reshape(D).astype(jnp.float32)
    b = bias.reshape(D).astype(jnp.float32)
    t_flat = t.reshape(N)
    out_itemsize = int(jnp.dtype(out_dtype).itemsize)

    # ---- choose output layout (lane-dense, zero column padding if possible) ----
    if D % _LANES == 0:
        mode, k, cols = "direct", 1, D
    else:
        cols_f = int(np.lcm(D, _LANES))
        k_f = cols_f // D
        if k_f * cols_f * 4 <= _SEL_BYTES_CAP and 8 * cols_f * out_itemsize <= _TILE_BYTES_CAP:
            mode, k, cols = "fold", k_f, cols_f
        else:
            mode, k, cols = "pad", 1, _round_up(D, _LANES)   # rare degenerate D

    if mode == "fold":
        w_row = jnp.tile(w, k).reshape(1, cols)
        b_row = jnp.tile(b, k).reshape(1, cols)
        sel = jnp.asarray(
            (np.arange(cols)[None, :] // D) == np.arange(k)[:, None],
            dtype=np.float32)                                 # (k, cols) 0/1 selector
    elif mode == "pad":
        w_row = jnp.zeros((1, cols), jnp.float32).at[0, :D].set(w)
        b_row = jnp.zeros((1, cols), jnp.float32).at[0, :D].set(b)
    else:  # direct
        w_row = w.reshape(1, cols)
        b_row = b.reshape(1, cols)

    # Folded row count; pad timestamps only up to a multiple of k (tiny / often a no-op).
    m = -(-N // k)
    if m * k != N:
        t_flat = jnp.pad(t_flat, (0, m * k - N))
    t_blk = t_flat.reshape(m, k)

    # ---- tile size: big enough to amortize per-step overhead, small enough for
    #      double-buffered VMEM and >= 2 grid steps (v7x 2-core sharding). ----
    sub = 16 if out_itemsize == 2 else 8                      # sublane tile for out dtype
    rows_by_vmem = max(sub, (_TILE_BYTES_CAP // (cols * out_itemsize)) // sub * sub)
    rows_two_steps = _round_up(max(1, -(-m // 2)), sub)
    tile_m = max(sub, min(_round_up(int(tile_rows), sub), rows_by_vmem, rows_two_steps))
    grid = (-(-m // tile_m),)                                 # boundary block is clipped

    cost = pl.CostEstimate(
        flops=2 * m * cols * (k + 1),
        transcendentals=m * cols,
        bytes_accessed=m * cols * out_itemsize + 4 * (m * k + (k + 2) * cols),
    )
    cparams = pltpu.CompilerParams(
        dimension_semantics=("parallel",),
        vmem_limit_bytes=_VMEM_LIMIT_BYTES,
    )
    out_shape = jax.ShapeDtypeStruct((m, cols), out_dtype)
    out_spec = pl.BlockSpec((tile_m, cols), lambda i: (i, 0))

    if mode == "fold":
        out_folded = pl.pallas_call(
            _time_encode_fold_kernel,
            out_shape=out_shape,
            grid=grid,
            in_specs=[
                pl.BlockSpec((tile_m, k), lambda i: (i, 0)),   # t tile, streamed
                pl.BlockSpec((k, cols), lambda i: (0, 0)),     # selector, resident
                pl.BlockSpec((1, cols), lambda i: (0, 0)),     # weights, resident
                pl.BlockSpec((1, cols), lambda i: (0, 0)),     # bias, resident
            ],
            out_specs=out_spec,
            compiler_params=cparams,
            cost_estimate=cost,
        )(t_blk, sel, w_row, b_row)
        # (m, k*D) row-major == (m*k, D) row-major: free reshape; trim only if padded.
        out = out_folded.reshape(m * k, D)
        return out if m * k == N else out[:N]
    else:
        out = pl.pallas_call(
            _time_encode_bcast_kernel,
            out_shape=out_shape,
            grid=grid,
            in_specs=[
                pl.BlockSpec((tile_m, 1), lambda i: (i, 0)),   # t tile, streamed
                pl.BlockSpec((1, cols), lambda i: (0, 0)),     # weights, resident
                pl.BlockSpec((1, cols), lambda i: (0, 0)),     # bias, resident
            ],
            out_specs=out_spec,
            compiler_params=cparams,
            cost_estimate=cost,
        )(t_blk, w_row, b_row)
        return out if cols == D else out[:, :D]               # slice only on pad fallback


if __name__ == "__main__":
    key = jax.random.PRNGKey(0)

    def _ref(t, w, b):
        tt = t if t.ndim == 2 else t[:, None]
        return jnp.cos(tt.astype(jnp.float32) * w.reshape(1, -1) + b[None, :])

    # Case 1: typical TGN dim (32 | 128 -> k=4 fold).  Small tile_rows so the
    # grid has several steps and the pipeline / boundary clipping is exercised.
    dim1, n1 = 32, 1000
    w1, b1 = init_time_encode_params(dim1)
    k1, key = jax.random.split(key)
    t1 = jax.random.uniform(k1, (n1,), dtype=jnp.float32) * 1000.0        # 1-D input
    out1 = jax.block_until_ready(time_encode(t1, w1, b1, tile_rows=64))
    assert out1.shape == (n1, dim1)
    np.testing.assert_allclose(np.asarray(out1), np.asarray(_ref(t1, w1, b1)),
                               rtol=1e-5, atol=5e-5)

    # Case 2: D not dividing 128 -> lcm fold (k=32, cols=3200), N % k != 0.
    dim2, n2 = 100, 203
    w2, b2 = init_time_encode_params(dim2)
    k2, key = jax.random.split(key)
    t2 = jax.random.uniform(k2, (n2, 1), dtype=jnp.float32) * 1000.0      # 2-D input
    out2 = jax.block_until_ready(time_encode(t2, w2, b2))
    assert out2.shape == (n2, dim2)
    np.testing.assert_allclose(np.asarray(out2), np.asarray(_ref(t2, w2, b2)),
                               rtol=1e-5, atol=5e-5)

    # Case 3: D % 128 == 0 -> direct lane-dense path, no folding, no slicing.
    dim3, n3 = 256, 50
    w3, b3 = init_time_encode_params(dim3)
    k3, key = jax.random.split(key)
    t3 = jax.random.uniform(k3, (n3,), dtype=jnp.float32) * 1000.0
    out3 = jax.block_until_ready(time_encode(t3, w3, b3))
    assert out3.shape == (n3, dim3)
    np.testing.assert_allclose(np.asarray(out3), np.asarray(_ref(t3, w3, b3)),
                               rtol=1e-5, atol=5e-5)

    # Case 4: degenerate D where the lcm selector would be too large ->
    # padded-lane fallback with a column slice.
    dim4, n4 = 130, 40
    w4, b4 = init_time_encode_params(dim4)
    k4, key = jax.random.split(key)
    t4 = jax.random.uniform(k4, (n4,), dtype=jnp.float32) * 1000.0
    out4 = jax.block_until_ready(time_encode(t4, w4, b4))
    assert out4.shape == (n4, dim4)
    np.testing.assert_allclose(np.asarray(out4), np.asarray(_ref(t4, w4, b4)),
                               rtol=1e-5, atol=5e-5)

    # Case 5: dimension == 0 edge case.
    w0, b0 = init_time_encode_params(0)
    out0 = jax.block_until_ready(time_encode(t3[:7], w0, b0))
    assert out0.shape == (7, 0)

    print("KERNEL_OK")
</pallas_src>

<mosaic_0001>
module attributes {stable_mosaic.version = 11 : i64} {
  func.func @_time_encode_fold_kernel(%arg0: i32, %arg1: memref<64x4xf32, #tpu.memory_space<vmem>>, %arg2: memref<4x128xf32, #tpu.memory_space<vmem>>, %arg3: memref<1x128xf32, #tpu.memory_space<vmem>>, %arg4: memref<1x128xf32, #tpu.memory_space<vmem>>, %arg5: memref<64x128xf32, #tpu.memory_space<vmem>>) attributes {dimension_semantics = [#tpu.dimension_semantics<parallel>], iteration_bounds = array<i64: 4>, scalar_prefetch = 0 : i64, scratch_operands = 0 : i64, tpu.core_type = #tpu.core_type<tc>, window_params = [{transform_indices = @transform_0, window_bounds = array<i64: 64, 4>}, {pipeline_mode = #tpu.pipeline_mode<synchronous>, transform_indices = @transform_1, window_bounds = array<i64: 4, 128>}, {pipeline_mode = #tpu.pipeline_mode<synchronous>, transform_indices = @transform_2, window_bounds = array<i64: 1, 128>}, {pipeline_mode = #tpu.pipeline_mode<synchronous>, transform_indices = @transform_3, window_bounds = array<i64: 1, 128>}, {transform_indices = @transform_4, window_bounds = array<i64: 64, 128>}]} {
    %c0 = arith.constant 0 : index
    %c0_0 = arith.constant 0 : index
    %0 = vector.load %arg1[%c0, %c0_0] : memref<64x4xf32, #tpu.memory_space<vmem>>, vector<64x4xf32>
    %c0_1 = arith.constant 0 : index
    %c0_2 = arith.constant 0 : index
    %1 = vector.load %arg2[%c0_1, %c0_2] : memref<4x128xf32, #tpu.memory_space<vmem>>, vector<4x128xf32>
    %cst = arith.constant dense<0.000000e+00> : vector<64x128xf32>
    %2 = tpu.matmul %0, %1, %cst {dimension_numbers = #tpu.dot_dimension_numbers<[1], [0], [0], [1], [0, 0, 1, 1], [], []>} : vector<64x4xf32>, vector<4x128xf32>, vector<64x128xf32> -> vector<64x128xf32>
    %c0_3 = arith.constant 0 : index
    %c0_4 = arith.constant 0 : index
    %3 = vector.load %arg3[%c0_3, %c0_4] : memref<1x128xf32, #tpu.memory_space<vmem>>, vector<1x128xf32>
    %4 = vector.broadcast %3 : vector<1x128xf32> to vector<64x128xf32>
    %5 = arith.mulf %2, %4 : vector<64x128xf32>
    %c0_5 = arith.constant 0 : index
    %c0_6 = arith.constant 0 : index
    %6 = vector.load %arg4[%c0_5, %c0_6] : memref<1x128xf32, #tpu.memory_space<vmem>>, vector<1x128xf32>
    %7 = vector.broadcast %6 : vector<1x128xf32> to vector<64x128xf32>
    %8 = arith.addf %5, %7 : vector<64x128xf32>
    %9 = math.cos %8 : vector<64x128xf32>
    %c0_7 = arith.constant 0 : index
    %c0_8 = arith.constant 0 : index
    %10 = vector.load %arg5[%c0_7, %c0_8] : memref<64x128xf32, #tpu.memory_space<vmem>>, vector<64x128xf32>
    tpu.vector_store %arg5[%c0_7, %c0_8], %9 {strides = array<i32>} : memref<64x128xf32, #tpu.memory_space<vmem>>, vector<64x128xf32>,
    return
  }
  func.func @transform_0(%arg0: i32) -> (i32, i32) {
    %c0_i32 = arith.constant 0 : i32
    %c0_i32_0 = arith.constant 0 : i32
    return %arg0, %c0_i32 : i32, i32
  }
  func.func @transform_1(%arg0: i32) -> (i32, i32) {
    %c0_i32 = arith.constant 0 : i32
    %c0_i32_0 = arith.constant 0 : i32
    %c0_i32_1 = arith.constant 0 : i32
    return %c0_i32, %c0_i32_0 : i32, i32
  }
  func.func @transform_2(%arg0: i32) -> (i32, i32) {
    %c0_i32 = arith.constant 0 : i32
    %c0_i32_0 = arith.constant 0 : i32
    %c0_i32_1 = arith.constant 0 : i32
    return %c0_i32, %c0_i32_0 : i32, i32
  }
  func.func @transform_3(%arg0: i32) -> (i32, i32) {
    %c0_i32 = arith.constant 0 : i32
    %c0_i32_0 = arith.constant 0 : i32
    %c0_i32_1 = arith.constant 0 : i32
    return %c0_i32, %c0_i32_0 : i32, i32
  }
  func.func @transform_4(%arg0: i32) -> (i32, i32) {
    %c0_i32 = arith.constant 0 : i32
    %c0_i32_0 = arith.constant 0 : i32
    return %arg0, %c0_i32 : i32, i32
  }
}

</mosaic_0001>

<llo_original>
// kernel: tpu_custom_call.1
$region0: #{tpu_custom_call.1}
  #allocation0 [shape = 'u32[]', space=smem, size = 0x4, offset = 0x4, fixed_abs, tag = 'smem constant byte address 0x4 - core index']
  #allocation1 [shape = 'u32[72,128]{1,0:T(1,128)}', space=vmem, size = 0x9000, scoped, tag = 'internal scratch']
  %s0 = inlined_call_operand.vmem [shape: f32[250,4], index: 0, kind: input, shape index: {}]
  %s1 = inlined_call_operand.vmem [shape: f32[4,128], index: 1, kind: input, shape index: {}]
  %s2 = inlined_call_operand.vmem [shape: f32[1,128], index: 2, kind: input, shape index: {}]
  %s3 = inlined_call_operand.vmem [shape: f32[1,128], index: 3, kind: input, shape index: {}]
  %s4 = inlined_call_operand.hbm [shape: f32[250,128], index: 4, kind: output, shape index: {}]
  %s5 = sld [smem:[#allocation0]]
  $region49: #{tpu_custom_call.1} parent=0
    _
  %s7 = ssub.s32 1, %s5
  %s8 = scalar_select 0, %s7, %s5
  $region1: #{tpu_custom_call.1} parent=0
    #allocation2 [shape = 'u8[65536]{0}', space=vmem, size = 0x10000, scoped, tag = 'output window, operand 0']
    #allocation3 [shape = 's32[2]{0}', space=sflag, size = 0x8, scoped, tag = 'scoped memory for tpu_custom_call.1']
    %9 = vsyncpa [#allocation3], 0
    %s10 = scalar_lea.sflag [#allocation3], 1
    %11 = vsyncpa %s10, 0
    loop: start=0, step=1, limit=6
    $region2: #{tpu_custom_call.1} parent=1 // loop_pre_header
      _
    $region3: #{tpu_custom_call.1} parent=1 // loop_header
      %s13 = sphi 0, %s17
      %p14 = scmp.ge.s32.totalorder %s13, 6
      %s23 = sphi 0, %s25
      %s26 = sphi 0, %s23
      %s27 = sphi 0, %s26
      %s43 = sphi 0, %s27
      %s47 = sphi 0, %s47
      %s49 = sphi 0, %s47
      %s50 = sphi 0, %s49
      %s64 = sphi 0, %s50
      %s68 = sphi 0, %s68
      %s70 = sphi 0, %s68
      %s71 = sphi 0, %s70
      %s85 = sphi 0, %s71
      %s89 = sphi 0, %s89
      %s91 = sphi 0, %s89
      %s92 = sphi 0, %s91
      %s106 = sphi 0, %s92
      %s112 = sphi 0, %s114
      %s115 = sphi 0, %s112
      %s116 = sphi 0, %s115
      %s132 = sphi 0, %s116
    $region4: #{tpu_custom_call.1} parent=1 // loop_header_branch
      %16 = sbr.rel (%p14) target = $region8
    $region5: #{tpu_custom_call.1} parent=1 // loop_body
      %s18 = ssub.s32 %s13, 1
      %s19 = ssub.s32 %s13, 2
      %s20 = sadd.s32 %s13, 1
      %s21 = ssub.s32 %s13, %s20
      %p22 = scmp.eq.s32.totalorder %s21, 0
      %s24 = sadd.s32 %s23, 1
      %s25 = scalar_select %p22, %s23, %s24
      %p28 = pneg %p22
      %p29 = scmp.eq.s32.totalorder %s13, 3
      %p30 = por %p28, %p29
      %p31 = scmp.ne.s32.totalorder %s23, %s26
      %p32 = scmp.eq.s32.totalorder %s13, 0
      %p33 = por %p31, %p32
      %p34 = scmp.ne.s32.totalorder %s23, %s26
      %p35 = scmp.eq.s32.totalorder %s18, 3
      %p36 = por %p34, %p35
      %p37 = scmp.ne.s32.totalorder %s26, %s27
      %p38 = scmp.eq.s32.totalorder %s18, 0
      %p39 = por %p37, %p38
      %p40 = scmp.ne.s32.totalorder %s26, %s27
      %p41 = scmp.eq.s32.totalorder %s19, 3
      %p42 = por %p40, %p41
      %p44 = scmp.ne.s32.totalorder %s27, %s43
      %p45 = scmp.eq.s32.totalorder %s19, 0
      %p46 = por %p44, %p45
      %s48 = sadd.s32 %s47, 1
      %p51 = scmp.eq.s32.totalorder %s13, 3
      %p52 = scmp.ne.s32.totalorder %s47, %s49
      %p53 = scmp.eq.s32.totalorder %s13, 0
      %p54 = por %p52, %p53
      %p55 = scmp.ne.s32.totalorder %s47, %s49
      %p56 = scmp.eq.s32.totalorder %s18, 3
      %p57 = por %p55, %p56
      %p58 = scmp.ne.s32.totalorder %s49, %s50
      %p59 = scmp.eq.s32.totalorder %s18, 0
      %p60 = por %p58, %p59
      %p61 = scmp.ne.s32.totalorder %s49, %s50
      %p62 = scmp.eq.s32.totalorder %s19, 3
      %p63 = por %p61, %p62
      %p65 = scmp.ne.s32.totalorder %s50, %s64
      %p66 = scmp.eq.s32.totalorder %s19, 0
      %p67 = por %p65, %p66
      %s69 = sadd.s32 %s68, 1
      %p72 = scmp.eq.s32.totalorder %s13, 3
      %p73 = scmp.ne.s32.totalorder %s68, %s70
      %p74 = scmp.eq.s32.totalorder %s13, 0
      %p75 = por %p73, %p74
      %p76 = scmp.ne.s32.totalorder %s68, %s70
      %p77 = scmp.eq.s32.totalorder %s18, 3
      %p78 = por %p76, %p77
      %p79 = scmp.ne.s32.totalorder %s70, %s71
      %p80 = scmp.eq.s32.totalorder %s18, 0
      %p81 = por %p79, %p80
      %p82 = scmp.ne.s32.totalorder %s70, %s71
      %p83 = scmp.eq.s32.totalorder %s19, 3
      %p84 = por %p82, %p83
      %p86 = scmp.ne.s32.totalorder %s71, %s85
      %p87 = scmp.eq.s32.totalorder %s19, 0
      %p88 = por %p86, %p87
      %s90 = sadd.s32 %s89, 1
      %p93 = scmp.eq.s32.totalorder %s13, 3
      %p94 = scmp.ne.s32.totalorder %s89, %s91
      %p95 = scmp.eq.s32.totalorder %s13, 0
      %p96 = por %p94, %p95
      %p97 = scmp.ne.s32.totalorder %s89, %s91
      %p98 = scmp.eq.s32.totalorder %s18, 3
      %p99 = por %p97, %p98
      %p100 = scmp.ne.s32.totalorder %s91, %s92
      %p101 = scmp.eq.s32.totalorder %s18, 0
      %p102 = por %p100, %p101
      %p103 = scmp.ne.s32.totalorder %s91, %s92
      %p104 = scmp.eq.s32.totalorder %s19, 3
      %p105 = por %p103, %p104
      %p107 = scmp.ne.s32.totalorder %s92, %s106
      %p108 = scmp.eq.s32.totalorder %s19, 0
      %p109 = por %p107, %p108
      %s110 = ssub.s32 %s13, %s20
      %p111 = scmp.eq.s32.totalorder %s110, 0
      %s113 = sadd.s32 %s112, 1
      %s114 = scalar_select %p111, %s112, %s113
      %p117 = pneg %p111
      %p118 = scmp.eq.s32.totalorder %s13, 3
      %p119 = por %p117, %p118
      %p120 = scmp.ne.s32.totalorder %s112, %s115
      %p121 = scmp.eq.s32.totalorder %s13, 0
      %p122 = por %p120, %p121
      %p123 = scmp.ne.s32.totalorder %s112, %s115
      %p124 = scmp.eq.s32.totalorder %s18, 3
      %p125 = por %p123, %p124
      %p126 = scmp.ne.s32.totalorder %s115, %s116
      %p127 = scmp.eq.s32.totalorder %s18, 0
      %p128 = por %p126, %p127
      %p129 = scmp.ne.s32.totalorder %s115, %s116
      %p130 = scmp.eq.s32.totalorder %s19, 3
      %p131 = por %p129, %p130
      %p133 = scmp.ne.s32.totalorder %s116, %s132
      %p134 = scmp.eq.s32.totalorder %s19, 0
      %p135 = por %p133, %p134
      %p136 = scmp.le.s32.totalorder 1, %s13
      %p137 = scmp.lt.s32.totalorder %s13, 5
      %p138 = pnand %p136, %p137
      %p139 = pneg %p138
      // Predicated region
      $region9: #{tpu_custom_call.1} parent=5 // pred_check
        _
      $region10: #{tpu_custom_call.1} parent=5 // pred_check_branch
        %141 = sbr.rel (%p138) target = $region12
      $region11: #{tpu_custom_call.1} parent=5 // pred_region
        %s142 = ssub.s32 %s13, 1
        // Predicated region
        $region13: #{tpu_custom_call.1} parent=11 // pred_check
          %p143 = pneg %p60
        $region14: #{tpu_custom_call.1} parent=11 // pred_check_branch
          %145 = sbr.rel (%p143) target = $region16
        $region15: #{tpu_custom_call.1} parent=11 // pred_region
          _
        $region16: #{tpu_custom_call.1} parent=11 // pred_fallthru
          _
        // Predicated region
        $region17: #{tpu_custom_call.1} parent=11 // pred_check
          %p146 = pneg %p81
        $region18: #{tpu_custom_call.1} parent=11 // pred_check_branch
          %148 = sbr.rel (%p146) target = $region20
        $region19: #{tpu_custom_call.1} parent=11 // pred_region
          _
        $region20: #{tpu_custom_call.1} parent=11 // pred_fallthru
          _
        // Predicated region
        $region21: #{tpu_custom_call.1} parent=11 // pred_check
          %p149 = pneg %p102
        $region22: #{tpu_custom_call.1} parent=11 // pred_check_branch
          %151 = sbr.rel (%p149) target = $region24
        $region23: #{tpu_custom_call.1} parent=11 // pred_region
          _
        $region24: #{tpu_custom_call.1} parent=11 // pred_fallthru
          _
      $region12: #{tpu_custom_call.1} parent=5 // pred_fallthru
        _
      %p152 = scmp.lt.s32.totalorder %s13, 4
      // Predicated region
      $region25: #{tpu_custom_call.1} parent=5 // pred_check
        %p153 = pneg %p152
      $region26: #{tpu_custom_call.1} parent=5 // pred_check_branch
        %155 = sbr.rel (%p153) target = $region28
      $region27: #{tpu_custom_call.1} parent=5 // pred_region
        // Predicated region
        $region29: #{tpu_custom_call.1} parent=27 // pred_check
          %p156 = pneg %p33
        $region30: #{tpu_custom_call.1} parent=27 // pred_check_branch
          %158 = sbr.rel (%p156) target = $region32
        $region31: #{tpu_custom_call.1} parent=27 // pred_region
          %s159 = smul.u32 8, %s13
          %p160 = scmp.lt.s32.totalorder %s159, 31
          %s161 = scalar_select %p160, %s159, 31
          %s162 = smul.addr %s161, 8
          %s163 = scalar_lea.vmem %s0, %s162
          %s164 = smul.u32 8, %s13
        $region32: #{tpu_custom_call.1} parent=27 // pred_fallthru
          _
      $region28: #{tpu_custom_call.1} parent=5 // pred_fallthru
        _
      %p165 = scmp.le.s32.totalorder 1, %s13
      %p166 = scmp.lt.s32.totalorder %s13, 5
      %p167 = pnand %p165, %p166
      %p168 = pneg %p167
      // Predicated region
      $region33: #{tpu_custom_call.1} parent=5 // pred_check
        _
      $region34: #{tpu_custom_call.1} parent=5 // pred_check_branch
        %170 = sbr.rel (%p167) target = $region36
      $region35: #{tpu_custom_call.1} parent=5 // pred_region
        %s171 = ssub.s32 %s13, 1
        %s172 = smul.u32 8, %s18
        %p173 = scmp.lt.s32.totalorder %s172, 31
        %s174 = scalar_select %p173, %s172, 31
        %s175 = smul.addr %s174, 8
        %s176 = scalar_lea.vmem %s0, %s175
        %p177 = pneg %p39
        %p178 = pneg %p36
        %p179 = pneg %p60
        %p180 = pneg %p57
        %p181 = pneg %p81
        %p182 = pneg %p78
        %p183 = pneg %p102
        %p184 = pneg %p99
        %p185 = pneg %p128
        %p186 = pneg %p125
        %s187 = sand.u32 %s115, 1
        %s188 = scalar_lea.sflag [#allocation3], %s187
        %s189 = sand.u32 %s115, 1
        %s190 = smul.addr %s189, 64
        %s191 = scalar_lea.vmem [#allocation2], %s190
        %s192 = smul.u32 8, %s18
        %p193 = scmp.lt.s32.totalorder %s192, 31
        %s194 = scalar_select %p193, %s192, 31
        %s195 = smul.addr %s194, 8
        %s196 = scalar_lea.vmem %s0, %s195
        %s197 = smul.u32 8, %s18
        %s198 = smul.u32 8, %s18
        %v199 = vld [vmem:[%s196] sm:$0xff]
        %v200 = vld [vmem:[%s196 + $0x8] sm:$0xff]
        %v201 = vld [vmem:[%s196 + $0x10] sm:$0xff]
        %v202 = vld [vmem:[%s196 + $0x18] sm:$0xff]
        %v203 = vld [vmem:[%s196 + $0x20] sm:$0xff]
        %v204 = vld [vmem:[%s196 + $0x28] sm:$0xff]
        %v205 = vld [vmem:[%s196 + $0x30] sm:$0xff]
        %v206 = vld [vmem:[%s196 + $0x38] sm:$0xff]
        %v207 = vld [vmem:[%s1] sm:$0xf]
        %vm208 = vcmask 31744
        %v210 = vsel %vm208, %v199, 0
        %v213 = vsel %vm208, %v200, 0
        %v216 = vsel %vm208, %v201, 0
        %v219 = vsel %vm208, %v202, 0
        %v222 = vsel %vm208, %v203, 0
        %v225 = vsel %vm208, %v204, 0
        %v228 = vsel %vm208, %v205, 0
        %v231 = vsel %vm208, %v206, 0
        %vm233 = vcmask 1043456
        %v235 = vsel %vm233, %v207, 0
        %237 = vmatpush.msra.mxu0 0.0
        %238 = vmatpush.msra.mxu0 0.0
        %239 = vmatpush.msra.mxu0 0.0
        %240 = vmatpush.msra.mxu0 0.0
        %241 = vmatpush.msra.mxu0 0.0
        %242 = vmatpush.msra.mxu0 0.0
        %243 = vmatpush.msra.mxu0 0.0
        %244 = vmatpush.msra.mxu0 0.0
        %245 = vmatpush.msra.mxu0 0.0
        %246 = vmatpush.msra.mxu0 0.0
        %247 = vmatpush.msra.mxu0 0.0
        %248 = vmatpush.msra.mxu0 0.0
        %249 = vmatpush.msra.mxu0 0.0
        %250 = vmatpush.msra.mxu0 0.0
        %251 = vmatpush.msra.mxu0 0.0
        %252 = vmatpush.msra.mxu0 %v235
        %253 = vmatmul.f32.gmra.mxu0 %v210
        %v254 = vpop.f32.mrf.mxu0
        %v255 = vadd.f32 0.0, %v254
        %256 = vmatmul.f32.gmra.mxu0 %v213
        %v257 = vpop.f32.mrf.mxu0
        %v258 = vadd.f32 0.0, %v257
        %259 = vmatmul.f32.gmra.mxu0 %v216
        %v260 = vpop.f32.mrf.mxu0
        %v261 = vadd.f32 0.0, %v260
        %262 = vmatmul.f32.gmra.mxu0 %v219
        %v263 = vpop.f32.mrf.mxu0
        %v264 = vadd.f32 0.0, %v263
        %265 = vmatmul.f32.gmra.mxu0 %v222
        %v266 = vpop.f32.mrf.mxu0
        %v267 = vadd.f32 0.0, %v266
        %268 = vmatmul.f32.gmra.mxu0 %v225
        %v269 = vpop.f32.mrf.mxu0
        %v270 = vadd.f32 0.0, %v269
        %271 = vmatmul.f32.gmra.mxu0 %v228
        %v272 = vpop.f32.mrf.mxu0
        %v273 = vadd.f32 0.0, %v272
        %274 = vmatmul.f32.gmra.mxu0 %v231
        %v275 = vpop.f32.mrf.mxu0
        %v276 = vadd.f32 0.0, %v275
        %277 = vdwg.mxu0
        %v278 = vld [vmem:[%s2] sm:$0x1]
        %v280 = vperm.slane %v278, 0
        %v282 = vmul.f32 %v255, %v280
        %v283 = vmul.f32 %v258, %v280
        %v284 = vmul.f32 %v261, %v280
        %v285 = vmul.f32 %v264, %v280
        %v286 = vmul.f32 %v267, %v280
        %v287 = vmul.f32 %v270, %v280
        %v288 = vmul.f32 %v273, %v280
        %v289 = vmul.f32 %v276, %v280
        %v290 = vld [vmem:[%s3] sm:$0x1]
        %v292 = vperm.slane %v290, 0
        %v294 = vadd.f32 %v282, %v292
        %v295 = vadd.f32 %v283, %v292
        %v296 = vadd.f32 %v284, %v292
        %v297 = vadd.f32 %v285, %v292
        %v298 = vadd.f32 %v286, %v292
        %v299 = vadd.f32 %v287, %v292
        %v300 = vadd.f32 %v288, %v292
        %v301 = vadd.f32 %v289, %v292
        %v302 = vand.u32 2147483647, %v294
        %vm303 = vcmp.le.f32.partialorder %v302, 0.7853982
        %vm304 = vcmp.lt.s32.totalorder %v294, 0
        %v305 = vand.u32 %v294, 2139095040
        %v306 = vshrl.u32 %v305, 23
        %v307 = vsub.s32 %v306, 127
        %v308 = vand.u32 2147483647, %v294
        %v309 = vand.u32 %v308, 8388607
        %v310 = vor.u32 %v309, 8388608
        %v311 = vsub.s32 0, %v310
        %v312 = vadd.s32 %v307, 1
        %vm313 = vcmp.gt.s32.totalorder %v312, 0
        %v314 = vsel %vm313, %v312, 0
        %v315 = vshrl.u32 %v314, 5
        %v316 = vand.u32 %v314, 31
        %v317 = vsub.s32 32, %v316
        %v318 = vshrl.u32 683565275, %v317
        %v319 = vshll.u32 683565275, %v316
        %v320 = vshrl.u32 2475754826, %v317
        %v321 = vor.u32 %v319, %v320
        %v322 = vshll.u32 2475754826, %v316
        %v323 = vshrl.u32 2131351028, %v317
        %v324 = vor.u32 %v322, %v323
        %v325 = vshll.u32 2131351028, %v316
        %v326 = vshrl.u32 2102212464, %v317
        %v327 = vor.u32 %v325, %v326
        %v328 = vshll.u32 2102212464, %v316
        %v329 = vshrl.u32 920167782, %v317
        %v330 = vor.u32 %v328, %v329
        %v331 = vshll.u32 920167782, %v316
        %v332 = vshrl.u32 1326507024, %v317
        %v333 = vor.u32 %v331, %v332
        %vm334 = vcmp.lt.s32.totalorder %v315, 1
        %vm335 = vcmp.lt.s32.totalorder %v315, 2
        %vm336 = vcmp.lt.s32.totalorder %v315, 3
        %vm337 = vcmp.lt.s32.totalorder %v315, 4
        %v338 = vsel %vm334, %v318, %v321
        %v339 = vsel %vm337, %v327, 2102212464
        %v340 = vsel %vm336, %v324, %v339
        %v341 = vsel %vm335, %v338, %v340
        %v342 = vsel %vm334, %v321, %v324
        %v343 = vsel %vm337, %v330, 920167782
        %v344 = vsel %vm336, %v327, %v343
        %v345 = vsel %vm335, %v342, %v344
        %v346 = vsel %vm334, %v324, %v327
        %v347 = vsel %vm337, %v333, 1326507024
        %v348 = vsel %vm336, %v330, %v347
        %v349 = vsel %vm335, %v346, %v348
        %v350 = vshll.u32 %v310, 8
        %v351 = vand.u32 %v350, 65535
        %v352 = vshrl.u32 %v350, 16
        %v353 = vand.u32 %v349, 65535
        %v354 = vshrl.u32 %v349, 16
        %v355 = vmul.u32 %v351, %v353
        %v356 = vmul.u32 %v351, %v354
        %v357 = vmul.u32 %v352, %v353
        %v358 = vmul.u32 %v352, %v354
        %v359 = vshll.u32 %v356, 16
        %v360 = vshrl.u32 %v356, 16
        %v361 = vshll.u32 %v357, 16
        %v362 = vshrl.u32 %v357, 16
        %vm363 = vc.u32 %v355, %v359
        %v364 = vsel %vm363, 1, 0
        %v365 = vadd.s32 %v355, %v359
        %v366 = vadd.s32 %v358, %v364
        %vm367 = vc.u32 %v365, %v361
        %v368 = vsel %vm367, 1, 0
        %v369 = vadd.s32 %v365, %v361
        %v370 = vadd.s32 %v366, %v368
        %v371 = vadd.s32 %v370, %v360
        %v372 = vadd.s32 %v371, %v362
        %v373 = vand.u32 %v350, 65535
        %v374 = vshrl.u32 %v350, 16
        %v375 = vand.u32 %v345, 65535
        %v376 = vshrl.u32 %v345, 16
        %v377 = vmul.u32 %v373, %v375
        %v378 = vmul.u32 %v373, %v376
        %v379 = vmul.u32 %v374, %v375
        %v380 = vmul.u32 %v374, %v376
        %v381 = vshll.u32 %v378, 16
        %v382 = vshrl.u32 %v378, 16
        %v383 = vshll.u32 %v379, 16
        %v384 = vshrl.u32 %v379, 16
        %vm385 = vc.u32 %v377, %v381
        %v386 = vsel %vm385, 1, 0
        %v387 = vadd.s32 %v377, %v381
        %v388 = vadd.s32 %v380, %v386
        %vm389 = vc.u32 %v387, %v383
        %v390 = vsel %vm389, 1, 0
        %v391 = vadd.s32 %v387, %v383
        %v392 = vadd.s32 %v388, %v390
        %v393 = vadd.s32 %v392, %v382
        %v394 = vadd.s32 %v393, %v384
        %v395 = vmul.u32 %v350, %v341
        %v396 = vadd.s32 %v372, %v391
        %vm397 = vc.u32 %v372, %v391
        %v398 = vadd.s32 %v394, 1
        %v399 = vsel %vm397, %v398, %v394
        %v400 = vadd.s32 %v395, %v399
        %v401 = vadd.s32 %v400, 536870912
        %v402 = vshrl.u32 %v401, 30
        %v403 = vshll.u32 %v402, 30
        %v404 = vsub.s32 %v400, %v403
        %vm405 = vcmp.lt.s32.totalorder %v404, 0
        %v406 = vsub.s32 0, %v404
        %v407 = vsel %vm405, %v406, %v404
        %v408 = vclz %v407
        %v409 = vsub.s32 %v408, 2
        %vm410 = vcmp.gt.s32.totalorder 0, %v409
        %v411 = vsel %vm410, 0, %v409
        %v412 = vsub.s32 32, %v411
        %v413 = vshll.u32 %v404, %v411
        %v414 = vshrl.u32 %v396, %v412
        %v415 = vor.u32 %v413, %v414
        %v416 = vsub.s32 4294967266, %v411
        %v417 = vadd.s32 %v416, 127
        %v418 = vshll.u32 %v417, 23
        %v419 = vor.u32 4788187, %v418
        %v420 = vand.u32 2147483647, %v419
        %v422 = vcvt.s32.f32 %v415
        %v423 = vmul.f32 %v422, %v420
        %v424 = vxor.u32 %v423, 2147483648
        %v425 = vsel %vm304, %v424, %v423
        %v426 = vsub.s32 4, %v402
        %v427 = vsel %vm304, %v426, %v402
        %v428 = vsel %vm303, %v294, %v425
        %v429 = vsel %vm303, 0, %v427
        %v430 = vmul.f32 %v428, %v428
        %v431 = vmul.f32 %v430, -0.001358992
        %v432 = vadd.f32 %v431, 0.041655596
        %v433 = vmul.f32 %v430, %v432
        %v434 = vadd.f32 %v433, -0.4999988
        %v435 = vmul.f32 %v430, %v434
        %v436 = vadd.f32 1.0, %v435
        %v437 = vmul.f32 %v428, %v428
        %v438 = vmul.f32 %v437, -0.00019511016
        %v439 = vadd.f32 %v438, 0.008332121
        %v440 = vmul.f32 %v437, %v439
        %v441 = vadd.f32 %v440, -0.16666654
        %v442 = vmul.f32 %v437, %v441
        %v443 = vadd.f32 %v442, 1.0
        %v444 = vmul.f32 %v443, %v428
        %vm445 = vweird.f32 %v294
        %v446 = vand.u32 %v429, 3
        %vm447 = vcmp.lt.s32.totalorder %v446, 2
        %vm448 = vcmp.eq.s32.totalorder %v446, 0
        %v449 = vxor.u32 %v444, 2147483648
        %v450 = vsel %vm448, %v436, %v449
        %vm451 = vcmp.eq.s32.totalorder %v446, 2
        %v452 = vxor.u32 %v436, 2147483648
        %v453 = vsel %vm451, %v452, %v444
        %v454 = vsel %vm447, %v450, %v453
        %v455 = vsel %vm445, nan, %v454
        %v456 = vand.u32 2147483647, %v295
        %vm457 = vcmp.le.f32.partialorder %v456, 0.7853982
        %vm458 = vcmp.lt.s32.totalorder %v295, 0
        %v459 = vand.u32 %v295, 2139095040
        %v460 = vshrl.u32 %v459, 23
        %v461 = vsub.s32 %v460, 127
        %v462 = vand.u32 2147483647, %v295
        %v463 = vand.u32 %v462, 8388607
        %v464 = vor.u32 %v463, 8388608
        %v465 = vsub.s32 0, %v464
        %v466 = vadd.s32 %v461, 1
        %vm467 = vcmp.gt.s32.totalorder %v466, 0
        %v468 = vsel %vm467, %v466, 0
        %v469 = vshrl.u32 %v468, 5
        %v470 = vand.u32 %v468, 31
        %v471 = vsub.s32 32, %v470
        %v472 = vshrl.u32 683565275, %v471
        %v473 = vshll.u32 683565275, %v470
        %v474 = vshrl.u32 2475754826, %v471
        %v475 = vor.u32 %v473, %v474
        %v476 = vshll.u32 2475754826, %v470
        %v477 = vshrl.u32 2131351028, %v471
        %v478 = vor.u32 %v476, %v477
        %v479 = vshll.u32 2131351028, %v470
        %v480 = vshrl.u32 2102212464, %v471
        %v481 = vor.u32 %v479, %v480
        %v482 = vshll.u32 2102212464, %v470
        %v483 = vshrl.u32 920167782, %v471
        %v484 = vor.u32 %v482, %v483
        %v485 = vshll.u32 920167782, %v470
        %v486 = vshrl.u32 1326507024, %v471
        %v487 = vor.u32 %v485, %v486
        %vm488 = vcmp.lt.s32.totalorder %v469, 1
        %vm489 = vcmp.lt.s32.totalorder %v469, 2
        %vm490 = vcmp.lt.s32.totalorder %v469, 3
        %vm491 = vcmp.lt.s32.totalorder %v469, 4
        %v492 = vsel %vm488, %v472, %v475
        %v493 = vsel %vm491, %v481, 2102212464
        %v494 = vsel %vm490, %v478, %v493
        %v495 = vsel %vm489, %v492, %v494
        %v496 = vsel %vm488, %v475, %v478
        %v497 = vsel %vm491, %v484, 920167782
        %v498 = vsel %vm490, %v481, %v497
        %v499 = vsel %vm489, %v496, %v498
        %v500 = vsel %vm488, %v478, %v481
        %v501 = vsel %vm491, %v487, 1326507024
        %v502 = vsel %vm490, %v484, %v501
        %v503 = vsel %vm489, %v500, %v502
        %v504 = vshll.u32 %v464, 8
        %v505 = vand.u32 %v504, 65535
        %v506 = vshrl.u32 %v504, 16
        %v507 = vand.u32 %v503, 65535
        %v508 = vshrl.u32 %v503, 16
        %v509 = vmul.u32 %v505, %v507
        %v510 = vmul.u32 %v505, %v508
        %v511 = vmul.u32 %v506, %v507
        %v512 = vmul.u32 %v506, %v508
        %v513 = vshll.u32 %v510, 16
        %v514 = vshrl.u32 %v510, 16
        %v515 = vshll.u32 %v511, 16
        %v516 = vshrl.u32 %v511, 16
        %vm517 = vc.u32 %v509, %v513
        %v518 = vsel %vm517, 1, 0
        %v519 = vadd.s32 %v509, %v513
        %v520 = vadd.s32 %v512, %v518
        %vm521 = vc.u32 %v519, %v515
        %v522 = vsel %vm521, 1, 0
        %v523 = vadd.s32 %v519, %v515
        %v524 = vadd.s32 %v520, %v522
        %v525 = vadd.s32 %v524, %v514
        %v526 = vadd.s32 %v525, %v516
        %v527 = vand.u32 %v504, 65535
        %v528 = vshrl.u32 %v504, 16
        %v529 = vand.u32 %v499, 65535
        %v530 = vshrl.u32 %v499, 16
        %v531 = vmul.u32 %v527, %v529
        %v532 = vmul.u32 %v527, %v530
        %v533 = vmul.u32 %v528, %v529
        %v534 = vmul.u32 %v528, %v530
        %v535 = vshll.u32 %v532, 16
        %v536 = vshrl.u32 %v532, 16
        %v537 = vshll.u32 %v533, 16
        %v538 = vshrl.u32 %v533, 16
        %vm539 = vc.u32 %v531, %v535
        %v540 = vsel %vm539, 1, 0
        %v541 = vadd.s32 %v531, %v535
        %v542 = vadd.s32 %v534, %v540
        %vm543 = vc.u32 %v541, %v537
        %v544 = vsel %vm543, 1, 0
        %v545 = vadd.s32 %v541, %v537
        %v546 = vadd.s32 %v542, %v544
        %v547 = vadd.s32 %v546, %v536
        %v548 = vadd.s32 %v547, %v538
        %v549 = vmul.u32 %v504, %v495
        %v550 = vadd.s32 %v526, %v545
        %vm551 = vc.u32 %v526, %v545
        %v552 = vadd.s32 %v548, 1
        %v553 = vsel %vm551, %v552, %v548
        %v554 = vadd.s32 %v549, %v553
        %v555 = vadd.s32 %v554, 536870912
        %v556 = vshrl.u32 %v555, 30
        %v557 = vshll.u32 %v556, 30
        %v558 = vsub.s32 %v554, %v557
        %vm559 = vcmp.lt.s32.totalorder %v558, 0
        %v560 = vsub.s32 0, %v558
        %v561 = vsel %vm559, %v560, %v558
        %v562 = vclz %v561
        %v563 = vsub.s32 %v562, 2
        %vm564 = vcmp.gt.s32.totalorder 0, %v563
        %v565 = vsel %vm564, 0, %v563
        %v566 = vsub.s32 32, %v565
        %v567 = vshll.u32 %v558, %v565
        %v568 = vshrl.u32 %v550, %v566
        %v569 = vor.u32 %v567, %v568
        %v570 = vsub.s32 4294967266, %v565
        %v571 = vadd.s32 %v570, 127
        %v572 = vshll.u32 %v571, 23
        %v573 = vor.u32 4788187, %v572
        %v574 = vand.u32 2147483647, %v573
        %v576 = vcvt.s32.f32 %v569
        %v577 = vmul.f32 %v576, %v574
        %v578 = vxor.u32 %v577, 2147483648
        %v579 = vsel %vm458, %v578, %v577
        %v580 = vsub.s32 4, %v556
        %v581 = vsel %vm458, %v580, %v556
        %v582 = vsel %vm457, %v295, %v579
        %v583 = vsel %vm457, 0, %v581
        %v584 = vmul.f32 %v582, %v582
        %v585 = vmul.f32 %v584, -0.001358992
        %v586 = vadd.f32 %v585, 0.041655596
        %v587 = vmul.f32 %v584, %v586
        %v588 = vadd.f32 %v587, -0.4999988
        %v589 = vmul.f32 %v584, %v588
        %v590 = vadd.f32 1.0, %v589
        %v591 = vmul.f32 %v582, %v582
        %v592 = vmul.f32 %v591, -0.00019511016
        %v593 = vadd.f32 %v592, 0.008332121
        %v594 = vmul.f32 %v591, %v593
        %v595 = vadd.f32 %v594, -0.16666654
        %v596 = vmul.f32 %v591, %v595
        %v597 = vadd.f32 %v596, 1.0
        %v598 = vmul.f32 %v597, %v582
        %vm599 = vweird.f32 %v295
        %v600 = vand.u32 %v583, 3
        %vm601 = vcmp.lt.s32.totalorder %v600, 2
        %vm602 = vcmp.eq.s32.totalorder %v600, 0
        %v603 = vxor.u32 %v598, 2147483648
        %v604 = vsel %vm602, %v590, %v603
        %vm605 = vcmp.eq.s32.totalorder %v600, 2
        %v606 = vxor.u32 %v590, 2147483648
        %v607 = vsel %vm605, %v606, %v598
        %v608 = vsel %vm601, %v604, %v607
        %v609 = vsel %vm599, nan, %v608
        %v610 = vand.u32 2147483647, %v296
        %vm611 = vcmp.le.f32.partialorder %v610, 0.7853982
        %vm612 = vcmp.lt.s32.totalorder %v296, 0
        %v613 = vand.u32 %v296, 2139095040
        %v614 = vshrl.u32 %v613, 23
        %v615 = vsub.s32 %v614, 127
        %v616 = vand.u32 2147483647, %v296
        %v617 = vand.u32 %v616, 8388607
        %v618 = vor.u32 %v617, 8388608
        %v619 = vsub.s32 0, %v618
        %v620 = vadd.s32 %v615, 1
        %vm621 = vcmp.gt.s32.totalorder %v620, 0
        %v622 = vsel %vm621, %v620, 0
        %v623 = vshrl.u32 %v622, 5
        %v624 = vand.u32 %v622, 31
        %v625 = vsub.s32 32, %v624
        %v626 = vshrl.u32 683565275, %v625
        %v627 = vshll.u32 683565275, %v624
        %v628 = vshrl.u32 2475754826, %v625
        %v629 = vor.u32 %v627, %v628
        %v630 = vshll.u32 2475754826, %v624
        %v631 = vshrl.u32 2131351028, %v625
        %v632 = vor.u32 %v630, %v631
        %v633 = vshll.u32 2131351028, %v624
        %v634 = vshrl.u32 2102212464, %v625
        %v635 = vor.u32 %v633, %v634
        %v636 = vshll.u32 2102212464, %v624
        %v637 = vshrl.u32 920167782, %v625
        %v638 = vor.u32 %v636, %v637
        %v639 = vshll.u32 920167782, %v624
        %v640 = vshrl.u32 1326507024, %v625
        %v641 = vor.u32 %v639, %v640
        %vm642 = vcmp.lt.s32.totalorder %v623, 1
        %vm643 = vcmp.lt.s32.totalorder %v623, 2
        %vm644 = vcmp.lt.s32.totalorder %v623, 3
        %vm645 = vcmp.lt.s32.totalorder %v623, 4
        %v646 = vsel %vm642, %v626, %v629
        %v647 = vsel %vm645, %v635, 2102212464
        %v648 = vsel %vm644, %v632, %v647
        %v649 = vsel %vm643, %v646, %v648
        %v650 = vsel %vm642, %v629, %v632
        %v651 = vsel %vm645, %v638, 920167782
        %v652 = vsel %vm644, %v635, %v651
        %v653 = vsel %vm643, %v650, %v652
        %v654 = vsel %vm642, %v632, %v635
        %v655 = vsel %vm645, %v641, 1326507024
        %v656 = vsel %vm644, %v638, %v655
        %v657 = vsel %vm643, %v654, %v656
        %v658 = vshll.u32 %v618, 8
        %v659 = vand.u32 %v658, 65535
        %v660 = vshrl.u32 %v658, 16
        %v661 = vand.u32 %v657, 65535
        %v662 = vshrl.u32 %v657, 16
        %v663 = vmul.u32 %v659, %v661
        %v664 = vmul.u32 %v659, %v662
        %v665 = vmul.u32 %v660, %v661
        %v666 = vmul.u32 %v660, %v662
        %v667 = vshll.u32 %v664, 16
        %v668 = vshrl.u32 %v664, 16
        %v669 = vshll.u32 %v665, 16
        %v670 = vshrl.u32 %v665, 16
        %vm671 = vc.u32 %v663, %v667
        %v672 = vsel %vm671, 1, 0
        %v673 = vadd.s32 %v663, %v667
        %v674 = vadd.s32 %v666, %v672
        %vm675 = vc.u32 %v673, %v669
        %v676 = vsel %vm675, 1, 0
        %v677 = vadd.s32 %v673, %v669
        %v678 = vadd.s32 %v674, %v676
        %v679 = vadd.s32 %v678, %v668
        %v680 = vadd.s32 %v679, %v670
        %v681 = vand.u32 %v658, 65535
        %v682 = vshrl.u32 %v658, 16
        %v683 = vand.u32 %v653, 65535
        %v684 = vshrl.u32 %v653, 16
        %v685 = vmul.u32 %v681, %v683
        %v686 = vmul.u32 %v681, %v684
        %v687 = vmul.u32 %v682, %v683
        %v688 = vmul.u32 %v682, %v684
        %v689 = vshll.u32 %v686, 16
        %v690 = vshrl.u32 %v686, 16
        %v691 = vshll.u32 %v687, 16
        %v692 = vshrl.u32 %v687, 16
        %vm693 = vc.u32 %v685, %v689
        %v694 = vsel %vm693, 1, 0
        %v695 = vadd.s32 %v685, %v689
        %v696 = vadd.s32 %v688, %v694
        %vm697 = vc.u32 %v695, %v691
        %v698 = vsel %vm697, 1, 0
        %v699 = vadd.s32 %v695, %v691
        %v700 = vadd.s32 %v696, %v698
        %v701 = vadd.s32 %v700, %v690
        %v702 = vadd.s32 %v701, %v692
        %v703 = vmul.u32 %v658, %v649
        %v704 = vadd.s32 %v680, %v699
        %vm705 = vc.u32 %v680, %v699
        %v706 = vadd.s32 %v702, 1
        %v707 = vsel %vm705, %v706, %v702
        %v708 = vadd.s32 %v703, %v707
        %v709 = vadd.s32 %v708, 536870912
        %v710 = vshrl.u32 %v709, 30
        %v711 = vshll.u32 %v710, 30
        %v712 = vsub.s32 %v708, %v711
        %vm713 = vcmp.lt.s32.totalorder %v712, 0
        %v714 = vsub.s32 0, %v712
        %v715 = vsel %vm713, %v714, %v712
        %v716 = vclz %v715
        %v717 = vsub.s32 %v716, 2
        %vm718 = vcmp.gt.s32.totalorder 0, %v717
        %v719 = vsel %vm718, 0, %v717
        %v720 = vsub.s32 32, %v719
        %v721 = vshll.u32 %v712, %v719
        %v722 = vshrl.u32 %v704, %v720
        %v723 = vor.u32 %v721, %v722
        %v724 = vsub.s32 4294967266, %v719
        %v725 = vadd.s32 %v724, 127
        %v726 = vshll.u32 %v725, 23
        %v727 = vor.u32 4788187, %v726
        %v728 = vand.u32 2147483647, %v727
        %v730 = vcvt.s32.f32 %v723
        %v731 = vmul.f32 %v730, %v728
        %v732 = vxor.u32 %v731, 2147483648
        %v733 = vsel %vm612, %v732, %v731
        %v734 = vsub.s32 4, %v710
        %v735 = vsel %vm612, %v734, %v710
        %v736 = vsel %vm611, %v296, %v733
        %v737 = vsel %vm611, 0, %v735
        %v738 = vmul.f32 %v736, %v736
        %v739 = vmul.f32 %v738, -0.001358992
        %v740 = vadd.f32 %v739, 0.041655596
        %v741 = vmul.f32 %v738, %v740
        %v742 = vadd.f32 %v741, -0.4999988
        %v743 = vmul.f32 %v738, %v742
        %v744 = vadd.f32 1.0, %v743
        %v745 = vmul.f32 %v736, %v736
        %v746 = vmul.f32 %v745, -0.00019511016
        %v747 = vadd.f32 %v746, 0.008332121
        %v748 = vmul.f32 %v745, %v747
        %v749 = vadd.f32 %v748, -0.16666654
        %v750 = vmul.f32 %v745, %v749
        %v751 = vadd.f32 %v750, 1.0
        %v752 = vmul.f32 %v751, %v736
        %vm753 = vweird.f32 %v296
        %v754 = vand.u32 %v737, 3
        %vm755 = vcmp.lt.s32.totalorder %v754, 2
        %vm756 = vcmp.eq.s32.totalorder %v754, 0
        %v757 = vxor.u32 %v752, 2147483648
        %v758 = vsel %vm756, %v744, %v757
        %vm759 = vcmp.eq.s32.totalorder %v754, 2
        %v760 = vxor.u32 %v744, 2147483648
        %v761 = vsel %vm759, %v760, %v752
        %v762 = vsel %vm755, %v758, %v761
        %v763 = vsel %vm753, nan, %v762
        %v764 = vand.u32 2147483647, %v297
        %vm765 = vcmp.le.f32.partialorder %v764, 0.7853982
        %vm766 = vcmp.lt.s32.totalorder %v297, 0
        %v767 = vand.u32 %v297, 2139095040
        %v768 = vshrl.u32 %v767, 23
        %v769 = vsub.s32 %v768, 127
        %v770 = vand.u32 2147483647, %v297
        %v771 = vand.u32 %v770, 8388607
        %v772 = vor.u32 %v771, 8388608
        %v773 = vsub.s32 0, %v772
        %v774 = vadd.s32 %v769, 1
        %vm775 = vcmp.gt.s32.totalorder %v774, 0
        %v776 = vsel %vm775, %v774, 0
        %v777 = vshrl.u32 %v776, 5
        %v778 = vand.u32 %v776, 31
        %v779 = vsub.s32 32, %v778
        %v780 = vshrl.u32 683565275, %v779
        %v781 = vshll.u32 683565275, %v778
        %v782 = vshrl.u32 2475754826, %v779
        %v783 = vor.u32 %v781, %v782
        %v784 = vshll.u32 2475754826, %v778
        %v785 = vshrl.u32 2131351028, %v779
        %v786 = vor.u32 %v784, %v785
        %v787 = vshll.u32 2131351028, %v778
        %v788 = vshrl.u32 2102212464, %v779
        %v789 = vor.u32 %v787, %v788
        %v790 = vshll.u32 2102212464, %v778
        %v791 = vshrl.u32 920167782, %v779
        %v792 = vor.u32 %v790, %v791
        %v793 = vshll.u32 920167782, %v778
        %v794 = vshrl.u32 1326507024, %v779
        %v795 = vor.u32 %v793, %v794
        %vm796 = vcmp.lt.s32.totalorder %v777, 1
        %vm797 = vcmp.lt.s32.totalorder %v777, 2
        %vm798 = vcmp.lt.s32.totalorder %v777, 3
        %vm799 = vcmp.lt.s32.totalorder %v777, 4
        %v800 = vsel %vm796, %v780, %v783
        %v801 = vsel %vm799, %v789, 2102212464
        %v802 = vsel %vm798, %v786, %v801
        %v803 = vsel %vm797, %v800, %v802
        %v804 = vsel %vm796, %v783, %v786
        %v805 = vsel %vm799, %v792, 920167782
        %v806 = vsel %vm798, %v789, %v805
        %v807 = vsel %vm797, %v804, %v806
        %v808 = vsel %vm796, %v786, %v789
        %v809 = vsel %vm799, %v795, 1326507024
        %v810 = vsel %vm798, %v792, %v809
        %v811 = vsel %vm797, %v808, %v810
        %v812 = vshll.u32 %v772, 8
        %v813 = vand.u32 %v812, 65535
        %v814 = vshrl.u32 %v812, 16
        %v815 = vand.u32 %v811, 65535
        %v816 = vshrl.u32 %v811, 16
        %v817 = vmul.u32 %v813, %v815
        %v818 = vmul.u32 %v813, %v816
        %v819 = vmul.u32 %v814, %v815
        %v820 = vmul.u32 %v814, %v816
        %v821 = vshll.u32 %v818, 16
        %v822 = vshrl.u32 %v818, 16
        %v823 = vshll.u32 %v819, 16
        %v824 = vshrl.u32 %v819, 16
        %vm825 = vc.u32 %v817, %v821
        %v826 = vsel %vm825, 1, 0
        %v827 = vadd.s32 %v817, %v821
        %v828 = vadd.s32 %v820, %v826
        %vm829 = vc.u32 %v827, %v823
        %v830 = vsel %vm829, 1, 0
        %v831 = vadd.s32 %v827, %v823
        %v832 = vadd.s32 %v828, %v830
        %v833 = vadd.s32 %v832, %v822
        %v834 = vadd.s32 %v833, %v824
        %v835 = vand.u32 %v812, 65535
        %v836 = vshrl.u32 %v812, 16
        %v837 = vand.u32 %v807, 65535
        %v838 = vshrl.u32 %v807, 16
        %v839 = vmul.u32 %v835, %v837
        %v840 = vmul.u32 %v835, %v838
        %v841 = vmul.u32 %v836, %v837
        %v842 = vmul.u32 %v836, %v838
        %v843 = vshll.u32 %v840, 16
        %v844 = vshrl.u32 %v840, 16
        %v845 = vshll.u32 %v841, 16
        %v846 = vshrl.u32 %v841, 16
        %vm847 = vc.u32 %v839, %v843
        %v848 = vsel %vm847, 1, 0
        %v849 = vadd.s32 %v839, %v843
        %v850 = vadd.s32 %v842, %v848
        %vm851 = vc.u32 %v849, %v845
        %v852 = vsel %vm851, 1, 0
        %v853 = vadd.s32 %v849, %v845
        %v854 = vadd.s32 %v850, %v852
        %v855 = vadd.s32 %v854, %v844
        %v856 = vadd.s32 %v855, %v846
        %v857 = vmul.u32 %v812, %v803
        %v858 = vadd.s32 %v834, %v853
        %vm859 = vc.u32 %v834, %v853
        %v860 = vadd.s32 %v856, 1
        %v861 = vsel %vm859, %v860, %v856
        %v862 = vadd.s32 %v857, %v861
        %v863 = vadd.s32 %v862, 536870912
        %v864 = vshrl.u32 %v863, 30
        %v865 = vshll.u32 %v864, 30
        %v866 = vsub.s32 %v862, %v865
        %vm867 = vcmp.lt.s32.totalorder %v866, 0
        %v868 = vsub.s32 0, %v866
        %v869 = vsel %vm867, %v868, %v866
        %v870 = vclz %v869
        %v871 = vsub.s32 %v870, 2
        %vm872 = vcmp.gt.s32.totalorder 0, %v871
        %v873 = vsel %vm872, 0, %v871
        %v874 = vsub.s32 32, %v873
        %v875 = vshll.u32 %v866, %v873
        %v876 = vshrl.u32 %v858, %v874
        %v877 = vor.u32 %v875, %v876
        %v878 = vsub.s32 4294967266, %v873
        %v879 = vadd.s32 %v878, 127
        %v880 = vshll.u32 %v879, 23
        %v881 = vor.u32 4788187, %v880
        %v882 = vand.u32 2147483647, %v881
        %v884 = vcvt.s32.f32 %v877
        %v885 = vmul.f32 %v884, %v882
        %v886 = vxor.u32 %v885, 2147483648
        %v887 = vsel %vm766, %v886, %v885
        %v888 = vsub.s32 4, %v864
        %v889 = vsel %vm766, %v888, %v864
        %v890 = vsel %vm765, %v297, %v887
        %v891 = vsel %vm765, 0, %v889
        %v892 = vmul.f32 %v890, %v890
        %v893 = vmul.f32 %v892, -0.001358992
        %v894 = vadd.f32 %v893, 0.041655596
        %v895 = vmul.f32 %v892, %v894
        %v896 = vadd.f32 %v895, -0.4999988
        %v897 = vmul.f32 %v892, %v896
        %v898 = vadd.f32 1.0, %v897
        %v899 = vmul.f32 %v890, %v890
        %v900 = vmul.f32 %v899, -0.00019511016
        %v901 = vadd.f32 %v900, 0.008332121
        %v902 = vmul.f32 %v899, %v901
        %v903 = vadd.f32 %v902, -0.16666654
        %v904 = vmul.f32 %v899, %v903
        %v905 = vadd.f32 %v904, 1.0
        %v906 = vmul.f32 %v905, %v890
        %vm907 = vweird.f32 %v297
        %v908 = vand.u32 %v891, 3
        %vm909 = vcmp.lt.s32.totalorder %v908, 2
        %vm910 = vcmp.eq.s32.totalorder %v908, 0
        %v911 = vxor.u32 %v906, 2147483648
        %v912 = vsel %vm910, %v898, %v911
        %vm913 = vcmp.eq.s32.totalorder %v908, 2
        %v914 = vxor.u32 %v898, 2147483648
        %v915 = vsel %vm913, %v914, %v906
        %v916 = vsel %vm909, %v912, %v915
        %v917 = vsel %vm907, nan, %v916
        %v918 = vand.u32 2147483647, %v298
        %vm919 = vcmp.le.f32.partialorder %v918, 0.7853982
        %vm920 = vcmp.lt.s32.totalorder %v298, 0
        %v921 = vand.u32 %v298, 2139095040
        %v922 = vshrl.u32 %v921, 23
        %v923 = vsub.s32 %v922, 127
        %v924 = vand.u32 2147483647, %v298
        %v925 = vand.u32 %v924, 8388607
        %v926 = vor.u32 %v925, 8388608
        %v927 = vsub.s32 0, %v926
        %v928 = vadd.s32 %v923, 1
        %vm929 = vcmp.gt.s32.totalorder %v928, 0
        %v930 = vsel %vm929, %v928, 0
        %v931 = vshrl.u32 %v930, 5
        %v932 = vand.u32 %v930, 31
        %v933 = vsub.s32 32, %v932
        %v934 = vshrl.u32 683565275, %v933
        %v935 = vshll.u32 683565275, %v932
        %v936 = vshrl.u32 2475754826, %v933
        %v937 = vor.u32 %v935, %v936
        %v938 = vshll.u32 2475754826, %v932
        %v939 = vshrl.u32 2131351028, %v933
        %v940 = vor.u32 %v938, %v939
        %v941 = vshll.u32 2131351028, %v932
        %v942 = vshrl.u32 2102212464, %v933
        %v943 = vor.u32 %v941, %v942
        %v944 = vshll.u32 2102212464, %v932
        %v945 = vshrl.u32 920167782, %v933
        %v946 = vor.u32 %v944, %v945
        %v947 = vshll.u32 920167782, %v932
        %v948 = vshrl.u32 1326507024, %v933
        %v949 = vor.u32 %v947, %v948
        %vm950 = vcmp.lt.s32.totalorder %v931, 1
        %vm951 = vcmp.lt.s32.totalorder %v931, 2
        %vm952 = vcmp.lt.s32.totalorder %v931, 3
        %vm953 = vcmp.lt.s32.totalorder %v931, 4
        %v954 = vsel %vm950, %v934, %v937
        %v955 = vsel %vm953, %v943, 2102212464
        %v956 = vsel %vm952, %v940, %v955
        %v957 = vsel %vm951, %v954, %v956
        %v958 = vsel %vm950, %v937, %v940
        %v959 = vsel %vm953, %v946, 920167782
        %v960 = vsel %vm952, %v943, %v959
        %v961 = vsel %vm951, %v958, %v960
        %v962 = vsel %vm950, %v940, %v943
        %v963 = vsel %vm953, %v949, 1326507024
        %v964 = vsel %vm952, %v946, %v963
        %v965 = vsel %vm951, %v962, %v964
        %v966 = vshll.u32 %v926, 8
        %v967 = vand.u32 %v966, 65535
        %v968 = vshrl.u32 %v966, 16
        %v969 = vand.u32 %v965, 65535
        %v970 = vshrl.u32 %v965, 16
        %v971 = vmul.u32 %v967, %v969
        %v972 = vmul.u32 %v967, %v970
        %v973 = vmul.u32 %v968, %v969
        %v974 = vmul.u32 %v968, %v970
        %v975 = vshll.u32 %v972, 16
        %v976 = vshrl.u32 %v972, 16
        %v977 = vshll.u32 %v973, 16
        %v978 = vshrl.u32 %v973, 16
        %vm979 = vc.u32 %v971, %v975
        %v980 = vsel %vm979, 1, 0
        %v981 = vadd.s32 %v971, %v975
        %v982 = vadd.s32 %v974, %v980
        %vm983 = vc.u32 %v981, %v977
        %v984 = vsel %vm983, 1, 0
        %v985 = vadd.s32 %v981, %v977
        %v986 = vadd.s32 %v982, %v984
        %v987 = vadd.s32 %v986, %v976
        %v988 = vadd.s32 %v987, %v978
        %v989 = vand.u32 %v966, 65535
        %v990 = vshrl.u32 %v966, 16
        %v991 = vand.u32 %v961, 65535
        %v992 = vshrl.u32 %v961, 16
        %v993 = vmul.u32 %v989, %v991
        %v994 = vmul.u32 %v989, %v992
        %v995 = vmul.u32 %v990, %v991
        %v996 = vmul.u32 %v990, %v992
        %v997 = vshll.u32 %v994, 16
        %v998 = vshrl.u32 %v994, 16
        %v999 = vshll.u32 %v995, 16
        %v1000 = vshrl.u32 %v995, 16
        %vm1001 = vc.u32 %v993, %v997
        %v1002 = vsel %vm1001, 1, 0
        %v1003 = vadd.s32 %v993, %v997
        %v1004 = vadd.s32 %v996, %v1002
        %vm1005 = vc.u32 %v1003, %v999
        %v1006 = vsel %vm1005, 1, 0
        %v1007 = vadd.s32 %v1003, %v999
        %v1008 = vadd.s32 %v1004, %v1006
        %v1009 = vadd.s32 %v1008, %v998
        %v1010 = vadd.s32 %v1009, %v1000
        %v1011 = vmul.u32 %v966, %v957
        %v1012 = vadd.s32 %v988, %v1007
        %vm1013 = vc.u32 %v988, %v1007
        %v1014 = vadd.s32 %v1010, 1
        %v1015 = vsel %vm1013, %v1014, %v1010
        %v1016 = vadd.s32 %v1011, %v1015
        %v1017 = vadd.s32 %v1016, 536870912
        %v1018 = vshrl.u32 %v1017, 30
        %v1019 = vshll.u32 %v1018, 30
        %v1020 = vsub.s32 %v1016, %v1019
        %vm1021 = vcmp.lt.s32.totalorder %v1020, 0
        %v1022 = vsub.s32 0, %v1020
        %v1023 = vsel %vm1021, %v1022, %v1020
        %v1024 = vclz %v1023
        %v1025 = vsub.s32 %v1024, 2
        %vm1026 = vcmp.gt.s32.totalorder 0, %v1025
        %v1027 = vsel %vm1026, 0, %v1025
        %v1028 = vsub.s32 32, %v1027
        %v1029 = vshll.u32 %v1020, %v1027
        %v1030 = vshrl.u32 %v1012, %v1028
        %v1031 = vor.u32 %v1029, %v1030
        %v1032 = vsub.s32 4294967266, %v1027
        %v1033 = vadd.s32 %v1032, 127
        %v1034 = vshll.u32 %v1033, 23
        %v1035 = vor.u32 4788187, %v1034
        %v1036 = vand.u32 2147483647, %v1035
        %v1038 = vcvt.s32.f32 %v1031
        %v1039 = vmul.f32 %v1038, %v1036
        %v1040 = vxor.u32 %v1039, 2147483648
        %v1041 = vsel %vm920, %v1040, %v1039
        %v1042 = vsub.s32 4, %v1018
        %v1043 = vsel %vm920, %v1042, %v1018
        %v1044 = vsel %vm919, %v298, %v1041
        %v1045 = vsel %vm919, 0, %v1043
        %v1046 = vmul.f32 %v1044, %v1044
        %v1047 = vmul.f32 %v1046, -0.001358992
        %v1048 = vadd.f32 %v1047, 0.041655596
        %v1049 = vmul.f32 %v1046, %v1048
        %v1050 = vadd.f32 %v1049, -0.4999988
        %v1051 = vmul.f32 %v1046, %v1050
        %v1052 = vadd.f32 1.0, %v1051
        %v1053 = vmul.f32 %v1044, %v1044
        %v1054 = vmul.f32 %v1053, -0.00019511016
        %v1055 = vadd.f32 %v1054, 0.008332121
        %v1056 = vmul.f32 %v1053, %v1055
        %v1057 = vadd.f32 %v1056, -0.16666654
        %v1058 = vmul.f32 %v1053, %v1057
        %v1059 = vadd.f32 %v1058, 1.0
        %v1060 = vmul.f32 %v1059, %v1044
        %vm1061 = vweird.f32 %v298
        %v1062 = vand.u32 %v1045, 3
        %vm1063 = vcmp.lt.s32.totalorder %v1062, 2
        %vm1064 = vcmp.eq.s32.totalorder %v1062, 0
        %v1065 = vxor.u32 %v1060, 2147483648
        %v1066 = vsel %vm1064, %v1052, %v1065
        %vm1067 = vcmp.eq.s32.totalorder %v1062, 2
        %v1068 = vxor.u32 %v1052, 2147483648
        %v1069 = vsel %vm1067, %v1068, %v1060
        %v1070 = vsel %vm1063, %v1066, %v1069
        %v1071 = vsel %vm1061, nan, %v1070
        %v1072 = vand.u32 2147483647, %v299
        %vm1073 = vcmp.le.f32.partialorder %v1072, 0.7853982
        %vm1074 = vcmp.lt.s32.totalorder %v299, 0
        %v1075 = vand.u32 %v299, 2139095040
        %v1076 = vshrl.u32 %v1075, 23
        %v1077 = vsub.s32 %v1076, 127
        %v1078 = vand.u32 2147483647, %v299
        %v1079 = vand.u32 %v1078, 8388607
        %v1080 = vor.u32 %v1079, 8388608
        %v1081 = vsub.s32 0, %v1080
        %v1082 = vadd.s32 %v1077, 1
        %vm1083 = vcmp.gt.s32.totalorder %v1082, 0
        %v1084 = vsel %vm1083, %v1082, 0
        %v1085 = vshrl.u32 %v1084, 5
        %v1086 = vand.u32 %v1084, 31
        %v1087 = vsub.s32 32, %v1086
        %v1088 = vshrl.u32 683565275, %v1087
        %v1089 = vshll.u32 683565275, %v1086
        %v1090 = vshrl.u32 2475754826, %v1087
        %v1091 = vor.u32 %v1089, %v1090
        %v1092 = vshll.u32 2475754826, %v1086
        %v1093 = vshrl.u32 2131351028, %v1087
        %v1094 = vor.u32 %v1092, %v1093
        %v1095 = vshll.u32 2131351028, %v1086
        %v1096 = vshrl.u32 2102212464, %v1087
        %v1097 = vor.u32 %v1095, %v1096
        %v1098 = vshll.u32 2102212464, %v1086
        %v1099 = vshrl.u32 920167782, %v1087
        %v1100 = vor.u32 %v1098, %v1099
        %v1101 = vshll.u32 920167782, %v1086
        %v1102 = vshrl.u32 1326507024, %v1087
        %v1103 = vor.u32 %v1101, %v1102
        %vm1104 = vcmp.lt.s32.totalorder %v1085, 1
        %vm1105 = vcmp.lt.s32.totalorder %v1085, 2
        %vm1106 = vcmp.lt.s32.totalorder %v1085, 3
        %vm1107 = vcmp.lt.s32.totalorder %v1085, 4
        %v1108 = vsel %vm1104, %v1088, %v1091
        %v1109 = vsel %vm1107, %v1097, 2102212464
        %v1110 = vsel %vm1106, %v1094, %v1109
        %v1111 = vsel %vm1105, %v1108, %v1110
        %v1112 = vsel %vm1104, %v1091, %v1094
        %v1113 = vsel %vm1107, %v1100, 920167782
        %v1114 = vsel %vm1106, %v1097, %v1113
        %v1115 = vsel %vm1105, %v1112, %v1114
        %v1116 = vsel %vm1104, %v1094, %v1097
        %v1117 = vsel %vm1107, %v1103, 1326507024
        %v1118 = vsel %vm1106, %v1100, %v1117
        %v1119 = vsel %vm1105, %v1116, %v1118
        %v1120 = vshll.u32 %v1080, 8
        %v1121 = vand.u32 %v1120, 65535
        %v1122 = vshrl.u32 %v1120, 16
        %v1123 = vand.u32 %v1119, 65535
        %v1124 = vshrl.u32 %v1119, 16
        %v1125 = vmul.u32 %v1121, %v1123
        %v1126 = vmul.u32 %v1121, %v1124
        %v1127 = vmul.u32 %v1122, %v1123
        %v1128 = vmul.u32 %v1122, %v1124
        %v1129 = vshll.u32 %v1126, 16
        %v1130 = vshrl.u32 %v1126, 16
        %v1131 = vshll.u32 %v1127, 16
        %v1132 = vshrl.u32 %v1127, 16
        %vm1133 = vc.u32 %v1125, %v1129
        %v1134 = vsel %vm1133, 1, 0
        %v1135 = vadd.s32 %v1125, %v1129
        %v1136 = vadd.s32 %v1128, %v1134
        %vm1137 = vc.u32 %v1135, %v1131
        %v1138 = vsel %vm1137, 1, 0
        %v1139 = vadd.s32 %v1135, %v1131
        %v1140 = vadd.s32 %v1136, %v1138
        %v1141 = vadd.s32 %v1140, %v1130
        %v1142 = vadd.s32 %v1141, %v1132
        %v1143 = vand.u32 %v1120, 65535
        %v1144 = vshrl.u32 %v1120, 16
        %v1145 = vand.u32 %v1115, 65535
        %v1146 = vshrl.u32 %v1115, 16
        %v1147 = vmul.u32 %v1143, %v1145
        %v1148 = vmul.u32 %v1143, %v1146
        %v1149 = vmul.u32 %v1144, %v1145
        %v1150 = vmul.u32 %v1144, %v1146
        %v1151 = vshll.u32 %v1148, 16
        %v1152 = vshrl.u32 %v1148, 16
        %v1153 = vshll.u32 %v1149, 16
        %v1154 = vshrl.u32 %v1149, 16
        %vm1155 = vc.u32 %v1147, %v1151
        %v1156 = vsel %vm1155, 1, 0
        %v1157 = vadd.s32 %v1147, %v1151
        %v1158 = vadd.s32 %v1150, %v1156
        %vm1159 = vc.u32 %v1157, %v1153
        %v1160 = vsel %vm1159, 1, 0
        %v1161 = vadd.s32 %v1157, %v1153
        %v1162 = vadd.s32 %v1158, %v1160
        %v1163 = vadd.s32 %v1162, %v1152
        %v1164 = vadd.s32 %v1163, %v1154
        %v1165 = vmul.u32 %v1120, %v1111
        %v1166 = vadd.s32 %v1142, %v1161
        %vm1167 = vc.u32 %v1142, %v1161
        %v1168 = vadd.s32 %v1164, 1
        %v1169 = vsel %vm1167, %v1168, %v1164
        %v1170 = vadd.s32 %v1165, %v1169
        %v1171 = vadd.s32 %v1170, 536870912
        %v1172 = vshrl.u32 %v1171, 30
        %v1173 = vshll.u32 %v1172, 30
        %v1174 = vsub.s32 %v1170, %v1173
        %vm1175 = vcmp.lt.s32.totalorder %v1174, 0
        %v1176 = vsub.s32 0, %v1174
        %v1177 = vsel %vm1175, %v1176, %v1174
        %v1178 = vclz %v1177
        %v1179 = vsub.s32 %v1178, 2
        %vm1180 = vcmp.gt.s32.totalorder 0, %v1179
        %v1181 = vsel %vm1180, 0, %v1179
        %v1182 = vsub.s32 32, %v1181
        %v1183 = vshll.u32 %v1174, %v1181
        %v1184 = vshrl.u32 %v1166, %v1182
        %v1185 = vor.u32 %v1183, %v1184
        %v1186 = vsub.s32 4294967266, %v1181
        %v1187 = vadd.s32 %v1186, 127
        %v1188 = vshll.u32 %v1187, 23
        %v1189 = vor.u32 4788187, %v1188
        %v1190 = vand.u32 2147483647, %v1189
        %v1192 = vcvt.s32.f32 %v1185
        %v1193 = vmul.f32 %v1192, %v1190
        %v1194 = vxor.u32 %v1193, 2147483648
        %v1195 = vsel %vm1074, %v1194, %v1193
        %v1196 = vsub.s32 4, %v1172
        %v1197 = vsel %vm1074, %v1196, %v1172
        %v1198 = vsel %vm1073, %v299, %v1195
        %v1199 = vsel %vm1073, 0, %v1197
        %v1200 = vmul.f32 %v1198, %v1198
        %v1201 = vmul.f32 %v1200, -0.001358992
        %v1202 = vadd.f32 %v1201, 0.041655596
        %v1203 = vmul.f32 %v1200, %v1202
        %v1204 = vadd.f32 %v1203, -0.4999988
        %v1205 = vmul.f32 %v1200, %v1204
        %v1206 = vadd.f32 1.0, %v1205
        %v1207 = vmul.f32 %v1198, %v1198
        %v1208 = vmul.f32 %v1207, -0.00019511016
        %v1209 = vadd.f32 %v1208, 0.008332121
        %v1210 = vmul.f32 %v1207, %v1209
        %v1211 = vadd.f32 %v1210, -0.16666654
        %v1212 = vmul.f32 %v1207, %v1211
        %v1213 = vadd.f32 %v1212, 1.0
        %v1214 = vmul.f32 %v1213, %v1198
        %vm1215 = vweird.f32 %v299
        %v1216 = vand.u32 %v1199, 3
        %vm1217 = vcmp.lt.s32.totalorder %v1216, 2
        %vm1218 = vcmp.eq.s32.totalorder %v1216, 0
        %v1219 = vxor.u32 %v1214, 2147483648
        %v1220 = vsel %vm1218, %v1206, %v1219
        %vm1221 = vcmp.eq.s32.totalorder %v1216, 2
        %v1222 = vxor.u32 %v1206, 2147483648
        %v1223 = vsel %vm1221, %v1222, %v1214
        %v1224 = vsel %vm1217, %v1220, %v1223
        %v1225 = vsel %vm1215, nan, %v1224
        %v1226 = vand.u32 2147483647, %v300
        %vm1227 = vcmp.le.f32.partialorder %v1226, 0.7853982
        %vm1228 = vcmp.lt.s32.totalorder %v300, 0
        %v1229 = vand.u32 %v300, 2139095040
        %v1230 = vshrl.u32 %v1229, 23
        %v1231 = vsub.s32 %v1230, 127
        %v1232 = vand.u32 2147483647, %v300
        %v1233 = vand.u32 %v1232, 8388607
        %v1234 = vor.u32 %v1233, 8388608
        %v1235 = vsub.s32 0, %v1234
        %v1236 = vadd.s32 %v1231, 1
        %vm1237 = vcmp.gt.s32.totalorder %v1236, 0
        %v1238 = vsel %vm1237, %v1236, 0
        %v1239 = vshrl.u32 %v1238, 5
        %v1240 = vand.u32 %v1238, 31
        %v1241 = vsub.s32 32, %v1240
        %v1242 = vshrl.u32 683565275, %v1241
        %v1243 = vshll.u32 683565275, %v1240
        %v1244 = vshrl.u32 2475754826, %v1241
        %v1245 = vor.u32 %v1243, %v1244
        %v1246 = vshll.u32 2475754826, %v1240
        %v1247 = vshrl.u32 2131351028, %v1241
        %v1248 = vor.u32 %v1246, %v1247
        %v1249 = vshll.u32 2131351028, %v1240
        %v1250 = vshrl.u32 2102212464, %v1241
        %v1251 = vor.u32 %v1249, %v1250
        %v1252 = vshll.u32 2102212464, %v1240
        %v1253 = vshrl.u32 920167782, %v1241
        %v1254 = vor.u32 %v1252, %v1253
        %v1255 = vshll.u32 920167782, %v1240
        %v1256 = vshrl.u32 1326507024, %v1241
        %v1257 = vor.u32 %v1255, %v1256
        %vm1258 = vcmp.lt.s32.totalorder %v1239, 1
        %vm1259 = vcmp.lt.s32.totalorder %v1239, 2
        %vm1260 = vcmp.lt.s32.totalorder %v1239, 3
        %vm1261 = vcmp.lt.s32.totalorder %v1239, 4
        %v1262 = vsel %vm1258, %v1242, %v1245
        %v1263 = vsel %vm1261, %v1251, 2102212464
        %v1264 = vsel %vm1260, %v1248, %v1263
        %v1265 = vsel %vm1259, %v1262, %v1264
        %v1266 = vsel %vm1258, %v1245, %v1248
        %v1267 = vsel %vm1261, %v1254, 920167782
        %v1268 = vsel %vm1260, %v1251, %v1267
        %v1269 = vsel %vm1259, %v1266, %v1268
        %v1270 = vsel %vm1258, %v1248, %v1251
        %v1271 = vsel %vm1261, %v1257, 1326507024
        %v1272 = vsel %vm1260, %v1254, %v1271
        %v1273 = vsel %vm1259, %v1270, %v1272
        %v1274 = vshll.u32 %v1234, 8
        %v1275 = vand.u32 %v1274, 65535
        %v1276 = vshrl.u32 %v1274, 16
        %v1277 = vand.u32 %v1273, 65535
        %v1278 = vshrl.u32 %v1273, 16
        %v1279 = vmul.u32 %v1275, %v1277
        %v1280 = vmul.u32 %v1275, %v1278
        %v1281 = vmul.u32 %v1276, %v1277
        %v1282 = vmul.u32 %v1276, %v1278
        %v1283 = vshll.u32 %v1280, 16
        %v1284 = vshrl.u32 %v1280, 16
        %v1285 = vshll.u32 %v1281, 16
        %v1286 = vshrl.u32 %v1281, 16
        %vm1287 = vc.u32 %v1279, %v1283
        %v1288 = vsel %vm1287, 1, 0
        %v1289 = vadd.s32 %v1279, %v1283
        %v1290 = vadd.s32 %v1282, %v1288
        %vm1291 = vc.u32 %v1289, %v1285
        %v1292 = vsel %vm1291, 1, 0
        %v1293 = vadd.s32 %v1289, %v1285
        %v1294 = vadd.s32 %v1290, %v1292
        %v1295 = vadd.s32 %v1294, %v1284
        %v1296 = vadd.s32 %v1295, %v1286
        %v1297 = vand.u32 %v1274, 65535
        %v1298 = vshrl.u32 %v1274, 16
        %v1299 = vand.u32 %v1269, 65535
        %v1300 = vshrl.u32 %v1269, 16
        %v1301 = vmul.u32 %v1297, %v1299
        %v1302 = vmul.u32 %v1297, %v1300
        %v1303 = vmul.u32 %v1298, %v1299
        %v1304 = vmul.u32 %v1298, %v1300
        %v1305 = vshll.u32 %v1302, 16
        %v1306 = vshrl.u32 %v1302, 16
        %v1307 = vshll.u32 %v1303, 16
        %v1308 = vshrl.u32 %v1303, 16
        %vm1309 = vc.u32 %v1301, %v1305
        %v1310 = vsel %vm1309, 1, 0
        %v1311 = vadd.s32 %v1301, %v1305
        %v1312 = vadd.s32 %v1304, %v1310
        %vm1313 = vc.u32 %v1311, %v1307
        %v1314 = vsel %vm1313, 1, 0
        %v1315 = vadd.s32 %v1311, %v1307
        %v1316 = vadd.s32 %v1312, %v1314
        %v1317 = vadd.s32 %v1316, %v1306
        %v1318 = vadd.s32 %v1317, %v1308
        %v1319 = vmul.u32 %v1274, %v1265
        %v1320 = vadd.s32 %v1296, %v1315
        %vm1321 = vc.u32 %v1296, %v1315
        %v1322 = vadd.s32 %v1318, 1
        %v1323 = vsel %vm1321, %v1322, %v1318
        %v1324 = vadd.s32 %v1319, %v1323
        %v1325 = vadd.s32 %v1324, 536870912
        %v1326 = vshrl.u32 %v1325, 30
        %v1327 = vshll.u32 %v1326, 30
        %v1328 = vsub.s32 %v1324, %v1327
        %vm1329 = vcmp.lt.s32.totalorder %v1328, 0
        %v1330 = vsub.s32 0, %v1328
        %v1331 = vsel %vm1329, %v1330, %v1328
        %v1332 = vclz %v1331
        %v1333 = vsub.s32 %v1332, 2
        %vm1334 = vcmp.gt.s32.totalorder 0, %v1333
        %v1335 = vsel %vm1334, 0, %v1333
        %v1336 = vsub.s32 32, %v1335
        %v1337 = vshll.u32 %v1328, %v1335
        %v1338 = vshrl.u32 %v1320, %v1336
        %v1339 = vor.u32 %v1337, %v1338
        %v1340 = vsub.s32 4294967266, %v1335
        %v1341 = vadd.s32 %v1340, 127
        %v1342 = vshll.u32 %v1341, 23
        %v1343 = vor.u32 4788187, %v1342
        %v1344 = vand.u32 2147483647, %v1343
        %v1346 = vcvt.s32.f32 %v1339
        %v1347 = vmul.f32 %v1346, %v1344
        %v1348 = vxor.u32 %v1347, 2147483648
        %v1349 = vsel %vm1228, %v1348, %v1347
        %v1350 = vsub.s32 4, %v1326
        %v1351 = vsel %vm1228, %v1350, %v1326
        %v1352 = vsel %vm1227, %v300, %v1349
        %v1353 = vsel %vm1227, 0, %v1351
        %v1354 = vmul.f32 %v1352, %v1352
        %v1355 = vmul.f32 %v1354, -0.001358992
        %v1356 = vadd.f32 %v1355, 0.041655596
        %v1357 = vmul.f32 %v1354, %v1356
        %v1358 = vadd.f32 %v1357, -0.4999988
        %v1359 = vmul.f32 %v1354, %v1358
        %v1360 = vadd.f32 1.0, %v1359
        %v1361 = vmul.f32 %v1352, %v1352
        %v1362 = vmul.f32 %v1361, -0.00019511016
        %v1363 = vadd.f32 %v1362, 0.008332121
        %v1364 = vmul.f32 %v1361, %v1363
        %v1365 = vadd.f32 %v1364, -0.16666654
        %v1366 = vmul.f32 %v1361, %v1365
        %v1367 = vadd.f32 %v1366, 1.0
        %v1368 = vmul.f32 %v1367, %v1352
        %vm1369 = vweird.f32 %v300
        %v1370 = vand.u32 %v1353, 3
        %vm1371 = vcmp.lt.s32.totalorder %v1370, 2
        %vm1372 = vcmp.eq.s32.totalorder %v1370, 0
        %v1373 = vxor.u32 %v1368, 2147483648
        %v1374 = vsel %vm1372, %v1360, %v1373
        %vm1375 = vcmp.eq.s32.totalorder %v1370, 2
        %v1376 = vxor.u32 %v1360, 2147483648
        %v1377 = vsel %vm1375, %v1376, %v1368
        %v1378 = vsel %vm1371, %v1374, %v1377
        %v1379 = vsel %vm1369, nan, %v1378
        %v1380 = vand.u32 2147483647, %v301
        %vm1381 = vcmp.le.f32.partialorder %v1380, 0.7853982
        %vm1382 = vcmp.lt.s32.totalorder %v301, 0
        %v1383 = vand.u32 %v301, 2139095040
        %v1384 = vshrl.u32 %v1383, 23
        %v1385 = vsub.s32 %v1384, 127
        %v1386 = vand.u32 2147483647, %v301
        %v1387 = vand.u32 %v1386, 8388607
        %v1388 = vor.u32 %v1387, 8388608
        %v1389 = vsub.s32 0, %v1388
        %v1390 = vadd.s32 %v1385, 1
        %vm1391 = vcmp.gt.s32.totalorder %v1390, 0
        %v1392 = vsel %vm1391, %v1390, 0
        %v1393 = vshrl.u32 %v1392, 5
        %v1394 = vand.u32 %v1392, 31
        %v1395 = vsub.s32 32, %v1394
        %v1396 = vshrl.u32 683565275, %v1395
        %v1397 = vshll.u32 683565275, %v1394
        %v1398 = vshrl.u32 2475754826, %v1395
        %v1399 = vor.u32 %v1397, %v1398
        %v1400 = vshll.u32 2475754826, %v1394
        %v1401 = vshrl.u32 2131351028, %v1395
        %v1402 = vor.u32 %v1400, %v1401
        %v1403 = vshll.u32 2131351028, %v1394
        %v1404 = vshrl.u32 2102212464, %v1395
        %v1405 = vor.u32 %v1403, %v1404
        %v1406 = vshll.u32 2102212464, %v1394
        %v1407 = vshrl.u32 920167782, %v1395
        %v1408 = vor.u32 %v1406, %v1407
        %v1409 = vshll.u32 920167782, %v1394
        %v1410 = vshrl.u32 1326507024, %v1395
        %v1411 = vor.u32 %v1409, %v1410
        %vm1412 = vcmp.lt.s32.totalorder %v1393, 1
        %vm1413 = vcmp.lt.s32.totalorder %v1393, 2
        %vm1414 = vcmp.lt.s32.totalorder %v1393, 3
        %vm1415 = vcmp.lt.s32.totalorder %v1393, 4
        %v1416 = vsel %vm1412, %v1396, %v1399
        %v1417 = vsel %vm1415, %v1405, 2102212464
        %v1418 = vsel %vm1414, %v1402, %v1417
        %v1419 = vsel %vm1413, %v1416, %v1418
        %v1420 = vsel %vm1412, %v1399, %v1402
        %v1421 = vsel %vm1415, %v1408, 920167782
        %v1422 = vsel %vm1414, %v1405, %v1421
        %v1423 = vsel %vm1413, %v1420, %v1422
        %v1424 = vsel %vm1412, %v1402, %v1405
        %v1425 = vsel %vm1415, %v1411, 1326507024
        %v1426 = vsel %vm1414, %v1408, %v1425
        %v1427 = vsel %vm1413, %v1424, %v1426
        %v1428 = vshll.u32 %v1388, 8
        %v1429 = vand.u32 %v1428, 65535
        %v1430 = vshrl.u32 %v1428, 16
        %v1431 = vand.u32 %v1427, 65535
        %v1432 = vshrl.u32 %v1427, 16
        %v1433 = vmul.u32 %v1429, %v1431
        %v1434 = vmul.u32 %v1429, %v1432
        %v1435 = vmul.u32 %v1430, %v1431
        %v1436 = vmul.u32 %v1430, %v1432
        %v1437 = vshll.u32 %v1434, 16
        %v1438 = vshrl.u32 %v1434, 16
        %v1439 = vshll.u32 %v1435, 16
        %v1440 = vshrl.u32 %v1435, 16
        %vm1441 = vc.u32 %v1433, %v1437
        %v1442 = vsel %vm1441, 1, 0
        %v1443 = vadd.s32 %v1433, %v1437
        %v1444 = vadd.s32 %v1436, %v1442
        %vm1445 = vc.u32 %v1443, %v1439
        %v1446 = vsel %vm1445, 1, 0
        %v1447 = vadd.s32 %v1443, %v1439
        %v1448 = vadd.s32 %v1444, %v1446
        %v1449 = vadd.s32 %v1448, %v1438
        %v1450 = vadd.s32 %v1449, %v1440
        %v1451 = vand.u32 %v1428, 65535
        %v1452 = vshrl.u32 %v1428, 16
        %v1453 = vand.u32 %v1423, 65535
        %v1454 = vshrl.u32 %v1423, 16
        %v1455 = vmul.u32 %v1451, %v1453
        %v1456 = vmul.u32 %v1451, %v1454
        %v1457 = vmul.u32 %v1452, %v1453
        %v1458 = vmul.u32 %v1452, %v1454
        %v1459 = vshll.u32 %v1456, 16
        %v1460 = vshrl.u32 %v1456, 16
        %v1461 = vshll.u32 %v1457, 16
        %v1462 = vshrl.u32 %v1457, 16
        %vm1463 = vc.u32 %v1455, %v1459
        %v1464 = vsel %vm1463, 1, 0
        %v1465 = vadd.s32 %v1455, %v1459
        %v1466 = vadd.s32 %v1458, %v1464
        %vm1467 = vc.u32 %v1465, %v1461
        %v1468 = vsel %vm1467, 1, 0
        %v1469 = vadd.s32 %v1465, %v1461
        %v1470 = vadd.s32 %v1466, %v1468
        %v1471 = vadd.s32 %v1470, %v1460
        %v1472 = vadd.s32 %v1471, %v1462
        %v1473 = vmul.u32 %v1428, %v1419
        %v1474 = vadd.s32 %v1450, %v1469
        %vm1475 = vc.u32 %v1450, %v1469
        %v1476 = vadd.s32 %v1472, 1
        %v1477 = vsel %vm1475, %v1476, %v1472
        %v1478 = vadd.s32 %v1473, %v1477
        %v1479 = vadd.s32 %v1478, 536870912
        %v1480 = vshrl.u32 %v1479, 30
        %v1481 = vshll.u32 %v1480, 30
        %v1482 = vsub.s32 %v1478, %v1481
        %vm1483 = vcmp.lt.s32.totalorder %v1482, 0
        %v1484 = vsub.s32 0, %v1482
        %v1485 = vsel %vm1483, %v1484, %v1482
        %v1486 = vclz %v1485
        %v1487 = vsub.s32 %v1486, 2
        %vm1488 = vcmp.gt.s32.totalorder 0, %v1487
        %v1489 = vsel %vm1488, 0, %v1487
        %v1490 = vsub.s32 32, %v1489
        %v1491 = vshll.u32 %v1482, %v1489
        %v1492 = vshrl.u32 %v1474, %v1490
        %v1493 = vor.u32 %v1491, %v1492
        %v1494 = vsub.s32 4294967266, %v1489
        %v1495 = vadd.s32 %v1494, 127
        %v1496 = vshll.u32 %v1495, 23
        %v1497 = vor.u32 4788187, %v1496
        %v1498 = vand.u32 2147483647, %v1497
        %v1500 = vcvt.s32.f32 %v1493
        %v1501 = vmul.f32 %v1500, %v1498
        %v1502 = vxor.u32 %v1501, 2147483648
        %v1503 = vsel %vm1382, %v1502, %v1501
        %v1504 = vsub.s32 4, %v1480
        %v1505 = vsel %vm1382, %v1504, %v1480
        %v1506 = vsel %vm1381, %v301, %v1503
        %v1507 = vsel %vm1381, 0, %v1505
        %v1508 = vmul.f32 %v1506, %v1506
        %v1509 = vmul.f32 %v1508, -0.001358992
        %v1510 = vadd.f32 %v1509, 0.041655596
        %v1511 = vmul.f32 %v1508, %v1510
        %v1512 = vadd.f32 %v1511, -0.4999988
        %v1513 = vmul.f32 %v1508, %v1512
        %v1514 = vadd.f32 1.0, %v1513
        %v1515 = vmul.f32 %v1506, %v1506
        %v1516 = vmul.f32 %v1515, -0.00019511016
        %v1517 = vadd.f32 %v1516, 0.008332121
        %v1518 = vmul.f32 %v1515, %v1517
        %v1519 = vadd.f32 %v1518, -0.16666654
        %v1520 = vmul.f32 %v1515, %v1519
        %v1521 = vadd.f32 %v1520, 1.0
        %v1522 = vmul.f32 %v1521, %v1506
        %vm1523 = vweird.f32 %v301
        %v1524 = vand.u32 %v1507, 3
        %vm1525 = vcmp.lt.s32.totalorder %v1524, 2
        %vm1526 = vcmp.eq.s32.totalorder %v1524, 0
        %v1527 = vxor.u32 %v1522, 2147483648
        %v1528 = vsel %vm1526, %v1514, %v1527
        %vm1529 = vcmp.eq.s32.totalorder %v1524, 2
        %v1530 = vxor.u32 %v1514, 2147483648
        %v1531 = vsel %vm1529, %v1530, %v1522
        %v1532 = vsel %vm1525, %v1528, %v1531
        %v1533 = vsel %vm1523, nan, %v1532
        %1534 = vst [vmem:[%s191] sm:$0xff] %v455
        %1535 = vst [vmem:[%s191 + $0x8] sm:$0xff] %v609
        %1536 = vst [vmem:[%s191 + $0x10] sm:$0xff] %v763
        %1537 = vst [vmem:[%s191 + $0x18] sm:$0xff] %v917
        %1538 = vst [vmem:[%s191 + $0x20] sm:$0xff] %v1071
        %1539 = vst [vmem:[%s191 + $0x28] sm:$0xff] %v1225
        %1540 = vst [vmem:[%s191 + $0x30] sm:$0xff] %v1379
        %1541 = vst [vmem:[%s191 + $0x38] sm:$0xff] %v1533
        %s1542 = sand.u32 %s115, 1
        %s1543 = scalar_lea.sflag [#allocation3], %s1542
        %s1544 = sand.u32 %s115, 1
        %s1545 = smul.addr %s1544, 64
        %s1546 = scalar_lea.vmem [#allocation2], %s1545
        // Predicated region
        $region37: #{tpu_custom_call.1} parent=35 // pred_check
          %p1547 = pneg %p125
        $region38: #{tpu_custom_call.1} parent=35 // pred_check_branch
          %1549 = sbr.rel (%p1547) target = $region40
        $region39: #{tpu_custom_call.1} parent=35 // pred_region
          %s1550 = smul.u32 8, %s18
          %1552 = vsyncadd %s1543, 0
          %s1553 = smul.addr %s1550, 8
          %s1554 = scalar_lea.hbm %s4, %s1553
          %s1555 = sshll.u32 %s1546, 4
          %s1556 = int_to_ptr.vmem [resolvable:$true] %s1555
          %s1557 = sshll.u32 %s1554, 4
          %s1558 = int_to_ptr.hbm [resolvable:$true] %s1557
          %1563 = dma.vmem_to_hbm [thread:$0]  %s1556, 1024, %s1558, %s1543, 128, 128, 8
        $region40: #{tpu_custom_call.1} parent=35 // pred_fallthru
          _
      $region36: #{tpu_custom_call.1} parent=5 // pred_fallthru
        _
      %p1564 = scmp.le.s32.totalorder 2, %s13
      // Predicated region
      $region41: #{tpu_custom_call.1} parent=5 // pred_check
        %p1565 = pneg %p1564
      $region42: #{tpu_custom_call.1} parent=5 // pred_check_branch
        %1567 = sbr.rel (%p1565) target = $region44
      $region43: #{tpu_custom_call.1} parent=5 // pred_region
        %s1568 = ssub.s32 %s13, 2
        // Predicated region
        $region45: #{tpu_custom_call.1} parent=43 // pred_check
          %p1569 = pneg %p131
        $region46: #{tpu_custom_call.1} parent=43 // pred_check_branch
          %1571 = sbr.rel (%p1569) target = $region48
        $region47: #{tpu_custom_call.1} parent=43 // pred_region
          %s1572 = sand.u32 %s116, 1
          %s1573 = scalar_lea.sflag [#allocation3], %s1572
          %s1574 = sand.u32 %s116, 1
          %s1575 = smul.addr %s1574, 64
          %s1576 = scalar_lea.vmem [#allocation2], %s1575
          %1578 = dma.done %s1573, 1024
        $region48: #{tpu_custom_call.1} parent=43 // pred_fallthru
          _
      $region44: #{tpu_custom_call.1} parent=5 // pred_fallthru
        _
    $region6: #{tpu_custom_call.1} parent=1 // loop_footer
      %s17 = sadd.s32 1, %s13
    $region7: #{tpu_custom_call.1} parent=1 // loop_footer_branch
      %12 = sbr.rel target = $region3
    $region8: #{tpu_custom_call.1} parent=1 // loop_exit
      _
    %1579 = vsyncpa [#allocation3], 1
    %s1580 = scalar_lea.sflag [#allocation3], 1
    %1581 = vsyncpa %s1580, 1

</llo_original>
